<compile_context>
chip_gen: v6e
topology: v6e:2x2x1
jax: 0.10.0
libtpu: 0.0.40
codegen_flags: <defaults>
</compile_context>

<pallas_src>
import functools

import jax
import jax.numpy as jnp
from jax.experimental import pallas as pl
from jax.experimental.pallas import tpu as pltpu

HIDDEN = 256
MAX_TILE = 512                          # row / K tile for large graphs
RESIDENT_HW_BYTES = 16 * 1024 * 1024    # keep H@W VMEM-resident below this (bf16)
NEG_INF = -1e30                         # padded-class logit bias


# --------------------------------------------------------------------------- #
# Kernels
# --------------------------------------------------------------------------- #
def _gcn_mid_kernel(a_ref, hw_ref, t_ref, wn_ref, o_ref, acc_ref, *,
                    tk, hw_resident):
    """One GCN layer:  out = relu(A @ HW + t) @ W_next'  (emits next HW)."""
    k = pl.program_id(1)

    @pl.when(k == 0)
    def _():
        acc_ref[...] = jnp.zeros_like(acc_ref)

    if hw_resident:
        off = pl.multiple_of(k * tk, 128)
        hw = hw_ref[pl.ds(off, tk), :]          # resident HW, slice the K chunk
    else:
        hw = hw_ref[...]                        # streamed (tk, HIDDEN) tile
    acc_ref[...] += jnp.dot(a_ref[...], hw, preferred_element_type=jnp.float32)

    @pl.when(k == pl.num_programs(1) - 1)
    def _():
        h = jnp.maximum(acc_ref[...] + t_ref[...], 0.0)        # bias+BN+ReLU (f32)
        o_ref[...] = jnp.dot(h.astype(jnp.bfloat16), wn_ref[...],
                             preferred_element_type=jnp.float32
                             ).astype(o_ref.dtype)


def _gcn_final_kernel(a_ref, hw_ref, t3_ref, wp1_ref, t4_ref, w2_ref, b2_ref,
                      o_ref, acc_ref, *, tk, hw_resident):
    """Layer-3 GCN fused with post_layer1 + BN4 + ReLU + post_layer2 + log_softmax."""
    k = pl.program_id(1)

    @pl.when(k == 0)
    def _():
        acc_ref[...] = jnp.zeros_like(acc_ref)

    if hw_resident:
        off = pl.multiple_of(k * tk, 128)
        hw = hw_ref[pl.ds(off, tk), :]
    else:
        hw = hw_ref[...]
    acc_ref[...] += jnp.dot(a_ref[...], hw, preferred_element_type=jnp.float32)

    @pl.when(k == pl.num_programs(1) - 1)
    def _():
        h3 = jnp.maximum(acc_ref[...] + t3_ref[...], 0.0)
        z = jnp.dot(h3.astype(jnp.bfloat16), wp1_ref[...],
                    preferred_element_type=jnp.float32) + t4_ref[...]
        z = jnp.maximum(z, 0.0)
        logits = jnp.dot(z.astype(jnp.bfloat16), w2_ref[...],
                         preferred_element_type=jnp.float32) + b2_ref[...]
        # padded columns carry a -1e30 bias -> exp() underflows to 0
        m = jnp.max(logits, axis=1, keepdims=True)
        zl = logits - m
        lse = jnp.log(jnp.sum(jnp.exp(zl), axis=1, keepdims=True))
        o_ref[...] = zl - lse


# --------------------------------------------------------------------------- #
# pallas_call wrappers
# --------------------------------------------------------------------------- #
def _hw_spec(n_pad, tk, hw_resident):
    if hw_resident:
        return pl.BlockSpec((n_pad, HIDDEN), lambda i, k: (0, 0))   # resident
    return pl.BlockSpec((tk, HIDDEN), lambda i, k: (k, 0))          # streamed


def _compiler_params(hw_resident, hw_bytes):
    # Resident HW may be double-buffered by the pipeline -> budget 2x + headroom.
    vmem_limit = (2 * hw_bytes + (12 << 20)) if hw_resident else None
    return pltpu.CompilerParams(
        dimension_semantics=("parallel", "arbitrary"),
        vmem_limit_bytes=vmem_limit)


def _gcn_mid_layer(a_pad, hw, t, w_next, *, tm, tk, hw_resident):
    n_pad = a_pad.shape[0]
    hw_bytes = hw.size * hw.dtype.itemsize
    kernel = functools.partial(_gcn_mid_kernel, tk=tk, hw_resident=hw_resident)
    return pl.pallas_call(
        kernel,
        out_shape=jax.ShapeDtypeStruct((n_pad, HIDDEN), jnp.bfloat16),
        grid_spec=pltpu.PrefetchScalarGridSpec(
            num_scalar_prefetch=0,
            grid=(n_pad // tm, n_pad // tk),
            in_specs=[
                pl.BlockSpec((tm, tk), lambda i, k: (i, k)),          # A_hat tile
                _hw_spec(n_pad, tk, hw_resident),                     # H @ W'
                pl.BlockSpec((1, HIDDEN), lambda i, k: (0, 0)),       # folded shift t
                pl.BlockSpec((HIDDEN, HIDDEN), lambda i, k: (0, 0)),  # next layer W'
            ],
            out_specs=pl.BlockSpec((tm, HIDDEN), lambda i, k: (i, 0)),
            scratch_shapes=[pltpu.VMEM((tm, HIDDEN), jnp.float32)],
        ),
        compiler_params=_compiler_params(hw_resident, hw_bytes),
    )(a_pad, hw, t, w_next)


def _gcn_final_layer(a_pad, hw, t3, wp1, t4, w2_pad, b2_pad, *, tm, tk,
                     hw_resident):
    n_pad = a_pad.shape[0]
    c_pad = w2_pad.shape[1]
    hw_bytes = hw.size * hw.dtype.itemsize
    kernel = functools.partial(_gcn_final_kernel, tk=tk, hw_resident=hw_resident)
    return pl.pallas_call(
        kernel,
        out_shape=jax.ShapeDtypeStruct((n_pad, c_pad), jnp.float32),
        grid_spec=pltpu.PrefetchScalarGridSpec(
            num_scalar_prefetch=0,
            grid=(n_pad // tm, n_pad // tk),
            in_specs=[
                pl.BlockSpec((tm, tk), lambda i, k: (i, k)),          # A_hat tile
                _hw_spec(n_pad, tk, hw_resident),                     # H @ W3'
                pl.BlockSpec((1, HIDDEN), lambda i, k: (0, 0)),       # t3
                pl.BlockSpec((HIDDEN, HIDDEN), lambda i, k: (0, 0)),  # W_post1' (BN4 folded)
                pl.BlockSpec((1, HIDDEN), lambda i, k: (0, 0)),       # t4
                pl.BlockSpec((HIDDEN, c_pad), lambda i, k: (0, 0)),   # W_post2 (lane-padded)
                pl.BlockSpec((1, c_pad), lambda i, k: (0, 0)),        # b_post2 (padded -1e30)
            ],
            out_specs=pl.BlockSpec((tm, c_pad), lambda i, k: (i, 0)),
            scratch_shapes=[pltpu.VMEM((tm, HIDDEN), jnp.float32)],
        ),
        compiler_params=_compiler_params(hw_resident, hw_bytes),
    )(a_pad, hw, t3, wp1, t4, w2_pad, b2_pad)


# --------------------------------------------------------------------------- #
# Graph / BN helpers
# --------------------------------------------------------------------------- #
def _gcn_norm(edge_index, num_nodes):
    """PyG gcn_norm (source->target): drop existing self loops, add one unit
    self loop per node, symmetric-normalize. Returns (src, dst, weight)."""
    src, dst = edge_index[0], edge_index[1]
    w = jnp.where(src == dst, 0.0, 1.0)            # existing self loops dropped
    loop = jnp.arange(num_nodes, dtype=src.dtype)
    src = jnp.concatenate([src, loop])
    dst = jnp.concatenate([dst, loop])
    w = jnp.concatenate([w, jnp.ones((num_nodes,), jnp.float32)])
    deg = jnp.zeros((num_nodes,), jnp.float32).at[dst].add(w)
    dinv = jnp.where(deg > 0, jax.lax.rsqrt(deg), 0.0)
    return src, dst, dinv[dst] * w * dinv[src]


def build_gcn_adjacency(edge_index, num_nodes, num_nodes_padded,
                        dtype=jnp.float32):
    """Dense normalized adjacency scattered directly at the padded shape."""
    # TODO(synk): for genuinely sparse graphs replace this dense O(N^2) matrix
    # with a CSR / scalar-prefetch gather kernel (neighbor offsets in SMEM
    # driving manual row DMAs) instead of padding + dense matmuls.
    src, dst, w = _gcn_norm(edge_index, num_nodes)
    a = jnp.zeros((num_nodes_padded, num_nodes_padded), jnp.float32)
    a = a.at[dst, src].add(w)
    return a.astype(dtype)


def fold_bn_into_linear(w, b, bn, eps=1e-5):
    """BN(h @ W + b) == h @ (W * s) + ((b - mean) * s + beta)."""
    gamma, beta, mean, var = bn
    s = gamma * jax.lax.rsqrt(var + eps)
    return w * s[None, :], ((b - mean) * s + beta).reshape(1, -1)


def _pick_tiles(n):
    """Pad rows to the layout minimum and cap the tile at MAX_TILE."""
    n128 = pl.cdiv(n, 128) * 128
    if n128 <= MAX_TILE:
        return n128, n128                 # one tile covers the whole graph
    n_pad = pl.cdiv(n, MAX_TILE) * MAX_TILE
    return MAX_TILE, n_pad


# --------------------------------------------------------------------------- #
# Model wrapper
# --------------------------------------------------------------------------- #
def aaf_gcnconv_forward(x, edge_index, params, num_classes):
    n = x.shape[0]
    tile, n_pad = _pick_tiles(n)
    tm = tk = tile
    c_pad = pl.cdiv(num_classes, 128) * 128

    hw_bytes = n_pad * HIDDEN * 2                       # bf16 H@W operand
    hw_resident = hw_bytes <= RESIDENT_HW_BYTES

    # Dense normalized adjacency, built directly at the padded shape, bf16 MXU input.
    a_pad = build_gcn_adjacency(edge_index, n, n_pad, dtype=jnp.bfloat16)

    # Fold conv/linear bias + BatchNorm (running stats) into weight/shift pairs.
    w1, t1 = fold_bn_into_linear(params["w1"], params["b1"], params["bn1"])
    w2, t2 = fold_bn_into_linear(params["w2"], params["b2"], params["bn2"])
    w3, t3 = fold_bn_into_linear(params["w3"], params["b3"], params["bn3"])
    wp1, t4 = fold_bn_into_linear(params["w_post1"], params["b_post1"],
                                  params["bn4"])

    # pre_layer + ReLU (dropout = identity in eval) and H0 @ W1' stay in XLA:
    # K = num_features is tiny and these are O(N*256*256), negligible vs. A.
    h0 = jnp.maximum(x @ params["w_pre"] + params["b_pre"][None, :], 0.0)
    hw = jnp.pad(h0 @ w1, ((0, n_pad - n), (0, 0))).astype(jnp.bfloat16)

    # Layers 1 & 2: relu(A @ HW + t) @ W_next'  (epilogue emits next layer's HW).
    hw = _gcn_mid_layer(a_pad, hw, t1, w2.astype(jnp.bfloat16),
                        tm=tm, tk=tk, hw_resident=hw_resident)
    hw = _gcn_mid_layer(a_pad, hw, t2, w3.astype(jnp.bfloat16),
                        tm=tm, tk=tk, hw_resident=hw_resident)

    # Layer 3 fused with post_layer1 + BN4 + ReLU + post_layer2 + log_softmax.
    w2p = jnp.zeros((HIDDEN, c_pad), jnp.float32
                    ).at[:, :num_classes].set(params["w_post2"]).astype(jnp.bfloat16)
    b2p = jnp.full((1, c_pad), NEG_INF, jnp.float32
                   ).at[0, :num_classes].set(params["b_post2"])
    out = _gcn_final_layer(a_pad, hw, t3, wp1.astype(jnp.bfloat16), t4, w2p, b2p,
                           tm=tm, tk=tk, hw_resident=hw_resident)
    return out[:n, :num_classes]


# --------------------------------------------------------------------------- #
# Pure-JAX fp32 reference (mirrors the torch module in eval mode)
# --------------------------------------------------------------------------- #
def reference_forward(x, edge_index, params, num_classes, eps=1e-5):
    n = x.shape[0]
    a = build_gcn_adjacency(edge_index, n, n, dtype=jnp.float32)

    def bn(h, stats):
        gamma, beta, mean, var = stats
        return (h - mean) * jax.lax.rsqrt(var + eps) * gamma + beta

    h = jnp.maximum(x @ params["w_pre"] + params["b_pre"], 0.0)
    for l in ("1", "2", "3"):
        h = a @ (h @ params["w" + l]) + params["b" + l]
        h = jnp.maximum(bn(h, params["bn" + l]), 0.0)
    h = h @ params["w_post1"] + params["b_post1"]
    h = jnp.maximum(bn(h, params["bn4"]), 0.0)
    logits = h @ params["w_post2"] + params["b_post2"]
    return jax.nn.log_softmax(logits, axis=1)


# --------------------------------------------------------------------------- #
# Parameter init (matches the torch module; batch_norm5 exists but is unused)
# --------------------------------------------------------------------------- #
def init_params(key, num_features, num_classes):
    ks = jax.random.split(key, 16)
    f32 = jnp.float32

    def lin(k, fan_in, fan_out):
        return 0.05 * jax.random.normal(k, (fan_in, fan_out), f32)

    def bn(k):
        gamma = 1.0 + 0.1 * jax.random.normal(k, (HIDDEN,), f32)
        beta = 0.05 * jax.random.normal(jax.random.fold_in(k, 1), (HIDDEN,), f32)
        running_mean = jnp.zeros((HIDDEN,), f32)
        running_var = jnp.ones((HIDDEN,), f32)
        return (gamma, beta, running_mean, running_var)

    return {
        "w_pre": lin(ks[0], num_features, HIDDEN), "b_pre": jnp.zeros((HIDDEN,), f32),
        "w1": lin(ks[1], HIDDEN, HIDDEN), "b1": jnp.zeros((HIDDEN,), f32),
        "w2": lin(ks[2], HIDDEN, HIDDEN), "b2": jnp.zeros((HIDDEN,), f32),
        "w3": lin(ks[3], HIDDEN, HIDDEN), "b3": jnp.zeros((HIDDEN,), f32),
        "w_post1": lin(ks[4], HIDDEN, HIDDEN), "b_post1": jnp.zeros((HIDDEN,), f32),
        "w_post2": lin(ks[5], HIDDEN, num_classes),
        "b_post2": jnp.zeros((num_classes,), f32),
        "bn1": bn(ks[6]), "bn2": bn(ks[7]), "bn3": bn(ks[8]), "bn4": bn(ks[9]),
    }


if __name__ == "__main__":
    key = jax.random.PRNGKey(0)
    num_nodes = 16
    num_features = 32
    num_classes = 8
    num_edges = 40

    k_x, k_e, k_p = jax.random.split(key, 3)
    x = jax.random.normal(k_x, (num_nodes, num_features), jnp.float32)
    edge_index = jax.random.randint(k_e, (2, num_edges), 0, num_nodes, jnp.int32)

    params = init_params(k_p, num_features, num_classes)

    fwd = jax.jit(functools.partial(aaf_gcnconv_forward, num_classes=num_classes))
    out = fwd(x, edge_index, params)
    jax.block_until_ready(out)

    assert out.shape == (num_nodes, num_classes)
    # log_softmax rows should exponentiate-sum to ~1.
    row_sums = jnp.sum(jnp.exp(out), axis=1)
    assert bool(jnp.all(jnp.abs(row_sums - 1.0) < 1e-3))
    # Match the fp32 pure-JAX reference (kernels use bf16 MXU inputs, f32 accum).
    ref = reference_forward(x, edge_index, params, num_classes)
    assert bool(jnp.max(jnp.abs(out - ref)) < 5e-2)

    print("KERNEL_OK")
</pallas_src>

<mosaic_0001>
module attributes {stable_mosaic.version = 11 : i64} {
  func.func private @main(%arg0: i32) attributes {dimension_semantics = [#tpu.dimension_semantics<core_parallel>], iteration_bounds = array<i64: 2>, tpu.core_type = #tpu.core_type<sc_scalar_subcore>, window_params = []} {
    return
  }
}

module attributes {stable_mosaic.version = 11 : i64} {
  func.func private @main(%arg0: i32) attributes {dimension_semantics = [#tpu.dimension_semantics<core_parallel>], iteration_bounds = array<i64: 2>, tpu.core_type = #tpu.core_type<sc_scalar_subcore>, window_params = []} {
    return
  }
}

module attributes {stable_mosaic.version = 11 : i64} {
  func.func @_gcn_final_kernel(%arg0: i32, %arg1: i32, %arg2: memref<128x128xbf16, #tpu.memory_space<vmem>>, %arg3: memref<128x256xbf16, #tpu.memory_space<vmem>>, %arg4: memref<1x256xf32, #tpu.memory_space<vmem>>, %arg5: memref<256x256xbf16, #tpu.memory_space<vmem>>, %arg6: memref<1x256xf32, #tpu.memory_space<vmem>>, %arg7: memref<256x128xbf16, #tpu.memory_space<vmem>>, %arg8: memref<1x128xf32, #tpu.memory_space<vmem>>, %arg9: memref<128x128xf32, #tpu.memory_space<vmem>>, %arg10: memref<128x256xf32, #tpu.memory_space<vmem>>) attributes {dimension_semantics = [#tpu.dimension_semantics<parallel>, #tpu.dimension_semantics<arbitrary>], iteration_bounds = array<i64: 1, 1>, scalar_prefetch = 0 : i64, scratch_operands = 1 : i64, tpu.core_type = #tpu.core_type<tc>, window_params = [{transform_indices = @transform_0, window_bounds = array<i64: 128, 128>}, {pipeline_mode = #tpu.pipeline_mode<synchronous>, transform_indices = @transform_1, window_bounds = array<i64: 128, 256>}, {pipeline_mode = #tpu.pipeline_mode<synchronous>, transform_indices = @transform_2, window_bounds = array<i64: 1, 256>}, {pipeline_mode = #tpu.pipeline_mode<synchronous>, transform_indices = @transform_3, window_bounds = array<i64: 256, 256>}, {pipeline_mode = #tpu.pipeline_mode<synchronous>, transform_indices = @transform_4, window_bounds = array<i64: 1, 256>}, {pipeline_mode = #tpu.pipeline_mode<synchronous>, transform_indices = @transform_5, window_bounds = array<i64: 256, 128>}, {pipeline_mode = #tpu.pipeline_mode<synchronous>, transform_indices = @transform_6, window_bounds = array<i64: 1, 128>}, {transform_indices = @transform_7, window_bounds = array<i64: 128, 128>}]} {
    %c0_i32 = arith.constant 0 : i32
    %0 = arith.cmpi eq, %arg1, %c0_i32 : i32
    %1 = arith.extui %0 : i1 to i32
    %c0_i32_0 = arith.constant 0 : i32
    %2 = arith.cmpi ne, %1, %c0_i32_0 : i32
    scf.if %2 {
      %cst_9 = arith.constant 0.000000e+00 : f32
      %15 = vector.broadcast %cst_9 : f32 to vector<128x256xf32>
      %c0_10 = arith.constant 0 : index
      %c0_11 = arith.constant 0 : index
      %16 = vector.load %arg10[%c0_10, %c0_11] : memref<128x256xf32, #tpu.memory_space<vmem>>, vector<128x256xf32>
      tpu.vector_store %arg10[%c0_10, %c0_11], %15 {strides = array<i32>} : memref<128x256xf32, #tpu.memory_space<vmem>>, vector<128x256xf32>,
    } else {
    }
    %c128_i32 = arith.constant 128 : i32
    %3 = arith.muli %arg1, %c128_i32 : i32
    %4 = tpu.assume_multiple %3, 128 : i32
    %5 = arith.index_cast %4 : i32 to index
    %c0 = arith.constant 0 : index
    %6 = vector.load %arg3[%5, %c0] : memref<128x256xbf16, #tpu.memory_space<vmem>>, vector<128x256xbf16>
    %c0_1 = arith.constant 0 : index
    %c0_2 = arith.constant 0 : index
    %7 = vector.load %arg10[%c0_1, %c0_2] : memref<128x256xf32, #tpu.memory_space<vmem>>, vector<128x256xf32>
    %c0_3 = arith.constant 0 : index
    %c0_4 = arith.constant 0 : index
    %8 = vector.load %arg2[%c0_3, %c0_4] : memref<128x128xbf16, #tpu.memory_space<vmem>>, vector<128x128xbf16>
    %cst = arith.constant dense<0.000000e+00> : vector<128x256xf32>
    %9 = tpu.matmul %8, %6, %cst {dimension_numbers = #tpu.dot_dimension_numbers<[1], [0], [0], [1], [0, 0, 1, 1], [], []>} : vector<128x128xbf16>, vector<128x256xbf16>, vector<128x256xf32> -> vector<128x256xf32>
    %10 = arith.addf %7, %9 : vector<128x256xf32>
    %c0_5 = arith.constant 0 : index
    %c0_6 = arith.constant 0 : index
    %11 = vector.load %arg10[%c0_5, %c0_6] : memref<128x256xf32, #tpu.memory_space<vmem>>, vector<128x256xf32>
    tpu.vector_store %arg10[%c0_5, %c0_6], %10 {strides = array<i32>} : memref<128x256xf32, #tpu.memory_space<vmem>>, vector<128x256xf32>,
    %c0_i32_7 = arith.constant 0 : i32
    %12 = arith.cmpi eq, %arg1, %c0_i32_7 : i32
    %13 = arith.extui %12 : i1 to i32
    %c0_i32_8 = arith.constant 0 : i32
    %14 = arith.cmpi ne, %13, %c0_i32_8 : i32
    scf.if %14 {
      %c0_9 = arith.constant 0 : index
      %c0_10 = arith.constant 0 : index
      %15 = vector.load %arg10[%c0_9, %c0_10] : memref<128x256xf32, #tpu.memory_space<vmem>>, vector<128x256xf32>
      %c0_11 = arith.constant 0 : index
      %c0_12 = arith.constant 0 : index
      %16 = vector.load %arg4[%c0_11, %c0_12] : memref<1x256xf32, #tpu.memory_space<vmem>>, vector<1x256xf32>
      %17 = vector.broadcast %16 : vector<1x256xf32> to vector<128x256xf32>
      %18 = arith.addf %15, %17 : vector<128x256xf32>
      %cst_13 = arith.constant 0.000000e+00 : f32
      %19 = vector.broadcast %cst_13 : f32 to vector<128x256xf32>
      %20 = arith.maximumf %18, %19 : vector<128x256xf32>
      %21 = arith.truncf %20 : vector<128x256xf32> to vector<128x256xbf16>
      %c0_14 = arith.constant 0 : index
      %c0_15 = arith.constant 0 : index
      %22 = vector.load %arg5[%c0_14, %c0_15] : memref<256x256xbf16, #tpu.memory_space<vmem>>, vector<256x256xbf16>
      %cst_16 = arith.constant dense<0.000000e+00> : vector<128x256xf32>
      %23 = tpu.matmul %21, %22, %cst_16 {dimension_numbers = #tpu.dot_dimension_numbers<[1], [0], [0], [1], [0, 0, 1, 1], [], []>} : vector<128x256xbf16>, vector<256x256xbf16>, vector<128x256xf32> -> vector<128x256xf32>
      %c0_17 = arith.constant 0 : index
      %c0_18 = arith.constant 0 : index
      %24 = vector.load %arg6[%c0_17, %c0_18] : memref<1x256xf32, #tpu.memory_space<vmem>>, vector<1x256xf32>
      %25 = vector.broadcast %24 : vector<1x256xf32> to vector<128x256xf32>
      %26 = arith.addf %23, %25 : vector<128x256xf32>
      %cst_19 = arith.constant 0.000000e+00 : f32
      %27 = vector.broadcast %cst_19 : f32 to vector<128x256xf32>
      %28 = arith.maximumf %26, %27 : vector<128x256xf32>
      %29 = arith.truncf %28 : vector<128x256xf32> to vector<128x256xbf16>
      %c0_20 = arith.constant 0 : index
      %c0_21 = arith.constant 0 : index
      %30 = vector.load %arg7[%c0_20, %c0_21] : memref<256x128xbf16, #tpu.memory_space<vmem>>, vector<256x128xbf16>
      %cst_22 = arith.constant dense<0.000000e+00> : vector<128x128xf32>
      %31 = tpu.matmul %29, %30, %cst_22 {dimension_numbers = #tpu.dot_dimension_numbers<[1], [0], [0], [1], [0, 0, 1, 1], [], []>} : vector<128x256xbf16>, vector<256x128xbf16>, vector<128x128xf32> -> vector<128x128xf32>
      %c0_23 = arith.constant 0 : index
      %c0_24 = arith.constant 0 : index
      %32 = vector.load %arg8[%c0_23, %c0_24] : memref<1x128xf32, #tpu.memory_space<vmem>>, vector<1x128xf32>
      %33 = vector.broadcast %32 : vector<1x128xf32> to vector<128x128xf32>
      %34 = arith.addf %31, %33 : vector<128x128xf32>
      %cst_25 = arith.constant dense<0xFF800000> : vector<128xf32>
      %35 = vector.multi_reduction <maximumf>, %34, %cst_25 [1] : vector<128x128xf32> to vector<128xf32>
      %36 = vector.shape_cast %35 : vector<128xf32> to vector<128x1xf32>
      %37 = vector.broadcast %36 : vector<128x1xf32> to vector<128x128xf32>
      %38 = arith.subf %34, %37 : vector<128x128xf32>
      %39 = math.exp %38 : vector<128x128xf32>
      %cst_26 = arith.constant dense<0.000000e+00> : vector<128xf32>
      %40 = vector.multi_reduction <add>, %39, %cst_26 [1] : vector<128x128xf32> to vector<128xf32>
      %41 = vector.shape_cast %40 : vector<128xf32> to vector<128x1xf32>
      %42 = math.log %41 : vector<128x1xf32>
      %43 = vector.broadcast %42 : vector<128x1xf32> to vector<128x128xf32>
      %44 = arith.subf %38, %43 : vector<128x128xf32>
      %c0_27 = arith.constant 0 : index
      %c0_28 = arith.constant 0 : index
      %45 = vector.load %arg9[%c0_27, %c0_28] : memref<128x128xf32, #tpu.memory_space<vmem>>, vector<128x128xf32>
      tpu.vector_store %arg9[%c0_27, %c0_28], %44 {strides = array<i32>} : memref<128x128xf32, #tpu.memory_space<vmem>>, vector<128x128xf32>,
    } else {
    }
    return
  }
  func.func @transform_0(%arg0: i32, %arg1: i32) -> (i32, i32) {
    %c0_i32 = arith.constant 0 : i32
    return %arg0, %arg1 : i32, i32
  }
  func.func @transform_1(%arg0: i32, %arg1: i32) -> (i32, i32) {
    %c0_i32 = arith.constant 0 : i32
    %c0_i32_0 = arith.constant 0 : i32
    %c0_i32_1 = arith.constant 0 : i32
    return %c0_i32, %c0_i32_0 : i32, i32
  }
  func.func @transform_2(%arg0: i32, %arg1: i32) -> (i32, i32) {
    %c0_i32 = arith.constant 0 : i32
    %c0_i32_0 = arith.constant 0 : i32
    %c0_i32_1 = arith.constant 0 : i32
    return %c0_i32, %c0_i32_0 : i32, i32
  }
  func.func @transform_3(%arg0: i32, %arg1: i32) -> (i32, i32) {
    %c0_i32 = arith.constant 0 : i32
    %c0_i32_0 = arith.constant 0 : i32
    %c0_i32_1 = arith.constant 0 : i32
    return %c0_i32, %c0_i32_0 : i32, i32
  }
  func.func @transform_4(%arg0: i32, %arg1: i32) -> (i32, i32) {
    %c0_i32 = arith.constant 0 : i32
    %c0_i32_0 = arith.constant 0 : i32
    %c0_i32_1 = arith.constant 0 : i32
    return %c0_i32, %c0_i32_0 : i32, i32
  }
  func.func @transform_5(%arg0: i32, %arg1: i32) -> (i32, i32) {
    %c0_i32 = arith.constant 0 : i32
    %c0_i32_0 = arith.constant 0 : i32
    %c0_i32_1 = arith.constant 0 : i32
    return %c0_i32, %c0_i32_0 : i32, i32
  }
  func.func @transform_6(%arg0: i32, %arg1: i32) -> (i32, i32) {
    %c0_i32 = arith.constant 0 : i32
    %c0_i32_0 = arith.constant 0 : i32
    %c0_i32_1 = arith.constant 0 : i32
    return %c0_i32, %c0_i32_0 : i32, i32
  }
  func.func @transform_7(%arg0: i32, %arg1: i32) -> (i32, i32) {
    %c0_i32 = arith.constant 0 : i32
    %c0_i32_0 = arith.constant 0 : i32
    return %arg0, %c0_i32 : i32, i32
  }
}

module attributes {stable_mosaic.version = 11 : i64} {
  func.func @_gcn_mid_kernel(%arg0: i32, %arg1: i32, %arg2: memref<128x128xbf16, #tpu.memory_space<vmem>>, %arg3: memref<128x256xbf16, #tpu.memory_space<vmem>>, %arg4: memref<1x256xf32, #tpu.memory_space<vmem>>, %arg5: memref<256x256xbf16, #tpu.memory_space<vmem>>, %arg6: memref<128x256xbf16, #tpu.memory_space<vmem>>, %arg7: memref<128x256xf32, #tpu.memory_space<vmem>>) attributes {dimension_semantics = [#tpu.dimension_semantics<parallel>, #tpu.dimension_semantics<arbitrary>], iteration_bounds = array<i64: 1, 1>, scalar_prefetch = 0 : i64, scratch_operands = 1 : i64, tpu.core_type = #tpu.core_type<tc>, window_params = [{transform_indices = @transform_0, window_bounds = array<i64: 128, 128>}, {pipeline_mode = #tpu.pipeline_mode<synchronous>, transform_indices = @transform_1, window_bounds = array<i64: 128, 256>}, {pipeline_mode = #tpu.pipeline_mode<synchronous>, transform_indices = @transform_2, window_bounds = array<i64: 1, 256>}, {pipeline_mode = #tpu.pipeline_mode<synchronous>, transform_indices = @transform_3, window_bounds = array<i64: 256, 256>}, {transform_indices = @transform_4, window_bounds = array<i64: 128, 256>}]} {
    %c0_i32 = arith.constant 0 : i32
    %0 = arith.cmpi eq, %arg1, %c0_i32 : i32
    %1 = arith.extui %0 : i1 to i32
    %c0_i32_0 = arith.constant 0 : i32
    %2 = arith.cmpi ne, %1, %c0_i32_0 : i32
    scf.if %2 {
      %cst_9 = arith.constant 0.000000e+00 : f32
      %15 = vector.broadcast %cst_9 : f32 to vector<128x256xf32>
      %c0_10 = arith.constant 0 : index
      %c0_11 = arith.constant 0 : index
      %16 = vector.load %arg7[%c0_10, %c0_11] : memref<128x256xf32, #tpu.memory_space<vmem>>, vector<128x256xf32>
      tpu.vector_store %arg7[%c0_10, %c0_11], %15 {strides = array<i32>} : memref<128x256xf32, #tpu.memory_space<vmem>>, vector<128x256xf32>,
    } else {
    }
    %c128_i32 = arith.constant 128 : i32
    %3 = arith.muli %arg1, %c128_i32 : i32
    %4 = tpu.assume_multiple %3, 128 : i32
    %5 = arith.index_cast %4 : i32 to index
    %c0 = arith.constant 0 : index
    %6 = vector.load %arg3[%5, %c0] : memref<128x256xbf16, #tpu.memory_space<vmem>>, vector<128x256xbf16>
    %c0_1 = arith.constant 0 : index
    %c0_2 = arith.constant 0 : index
    %7 = vector.load %arg7[%c0_1, %c0_2] : memref<128x256xf32, #tpu.memory_space<vmem>>, vector<128x256xf32>
    %c0_3 = arith.constant 0 : index
    %c0_4 = arith.constant 0 : index
    %8 = vector.load %arg2[%c0_3, %c0_4] : memref<128x128xbf16, #tpu.memory_space<vmem>>, vector<128x128xbf16>
    %cst = arith.constant dense<0.000000e+00> : vector<128x256xf32>
    %9 = tpu.matmul %8, %6, %cst {dimension_numbers = #tpu.dot_dimension_numbers<[1], [0], [0], [1], [0, 0, 1, 1], [], []>} : vector<128x128xbf16>, vector<128x256xbf16>, vector<128x256xf32> -> vector<128x256xf32>
    %10 = arith.addf %7, %9 : vector<128x256xf32>
    %c0_5 = arith.constant 0 : index
    %c0_6 = arith.constant 0 : index
    %11 = vector.load %arg7[%c0_5, %c0_6] : memref<128x256xf32, #tpu.memory_space<vmem>>, vector<128x256xf32>
    tpu.vector_store %arg7[%c0_5, %c0_6], %10 {strides = array<i32>} : memref<128x256xf32, #tpu.memory_space<vmem>>, vector<128x256xf32>,
    %c0_i32_7 = arith.constant 0 : i32
    %12 = arith.cmpi eq, %arg1, %c0_i32_7 : i32
    %13 = arith.extui %12 : i1 to i32
    %c0_i32_8 = arith.constant 0 : i32
    %14 = arith.cmpi ne, %13, %c0_i32_8 : i32
    scf.if %14 {
      %c0_9 = arith.constant 0 : index
      %c0_10 = arith.constant 0 : index
      %15 = vector.load %arg7[%c0_9, %c0_10] : memref<128x256xf32, #tpu.memory_space<vmem>>, vector<128x256xf32>
      %c0_11 = arith.constant 0 : index
      %c0_12 = arith.constant 0 : index
      %16 = vector.load %arg4[%c0_11, %c0_12] : memref<1x256xf32, #tpu.memory_space<vmem>>, vector<1x256xf32>
      %17 = vector.broadcast %16 : vector<1x256xf32> to vector<128x256xf32>
      %18 = arith.addf %15, %17 : vector<128x256xf32>
      %cst_13 = arith.constant 0.000000e+00 : f32
      %19 = vector.broadcast %cst_13 : f32 to vector<128x256xf32>
      %20 = arith.maximumf %18, %19 : vector<128x256xf32>
      %21 = arith.truncf %20 : vector<128x256xf32> to vector<128x256xbf16>
      %c0_14 = arith.constant 0 : index
      %c0_15 = arith.constant 0 : index
      %22 = vector.load %arg5[%c0_14, %c0_15] : memref<256x256xbf16, #tpu.memory_space<vmem>>, vector<256x256xbf16>
      %cst_16 = arith.constant dense<0.000000e+00> : vector<128x256xf32>
      %23 = tpu.matmul %21, %22, %cst_16 {dimension_numbers = #tpu.dot_dimension_numbers<[1], [0], [0], [1], [0, 0, 1, 1], [], []>} : vector<128x256xbf16>, vector<256x256xbf16>, vector<128x256xf32> -> vector<128x256xf32>
      %24 = arith.truncf %23 : vector<128x256xf32> to vector<128x256xbf16>
      %c0_17 = arith.constant 0 : index
      %c0_18 = arith.constant 0 : index
      %25 = vector.load %arg6[%c0_17, %c0_18] : memref<128x256xbf16, #tpu.memory_space<vmem>>, vector<128x256xbf16>
      tpu.vector_store %arg6[%c0_17, %c0_18], %24 {strides = array<i32>} : memref<128x256xbf16, #tpu.memory_space<vmem>>, vector<128x256xbf16>,
    } else {
    }
    return
  }
  func.func @transform_0(%arg0: i32, %arg1: i32) -> (i32, i32) {
    %c0_i32 = arith.constant 0 : i32
    return %arg0, %arg1 : i32, i32
  }
  func.func @transform_1(%arg0: i32, %arg1: i32) -> (i32, i32) {
    %c0_i32 = arith.constant 0 : i32
    %c0_i32_0 = arith.constant 0 : i32
    %c0_i32_1 = arith.constant 0 : i32
    return %c0_i32, %c0_i32_0 : i32, i32
  }
  func.func @transform_2(%arg0: i32, %arg1: i32) -> (i32, i32) {
    %c0_i32 = arith.constant 0 : i32
    %c0_i32_0 = arith.constant 0 : i32
    %c0_i32_1 = arith.constant 0 : i32
    return %c0_i32, %c0_i32_0 : i32, i32
  }
  func.func @transform_3(%arg0: i32, %arg1: i32) -> (i32, i32) {
    %c0_i32 = arith.constant 0 : i32
    %c0_i32_0 = arith.constant 0 : i32
    %c0_i32_1 = arith.constant 0 : i32
    return %c0_i32, %c0_i32_0 : i32, i32
  }
  func.func @transform_4(%arg0: i32, %arg1: i32) -> (i32, i32) {
    %c0_i32 = arith.constant 0 : i32
    %c0_i32_0 = arith.constant 0 : i32
    return %arg0, %c0_i32 : i32, i32
  }
}

</mosaic_0001>

<llo_original>
// kernel: aaf_gcnconv_forward.5
$region0: #{aaf_gcnconv_forward.5}
  #allocation0 [shape = 'u32[]', space=smem, size = 0x4, offset = 0x4, fixed_abs, tag = 'smem constant byte address 0x4 - core index']
  #allocation1 [shape = 'u32[144,128]{1,0:T(1,128)}', space=vmem, size = 0x12000, scoped, tag = 'internal scratch']
  #allocation2 [shape = 'f32[128,256]{1,0:T(8,128)}', space=vmem, size = 0x20000, scoped, tag = 'scratch operand']
  %s0 = inlined_call_operand.vmem [shape: bf16[128,128], index: 0, kind: input, shape index: {}]
  %s1 = inlined_call_operand.vmem [shape: bf16[128,256], index: 1, kind: input, shape index: {}]
  %s2 = inlined_call_operand.vmem [shape: f32[1,256], index: 2, kind: input, shape index: {}]
  %s3 = inlined_call_operand.vmem [shape: bf16[256,256], index: 3, kind: input, shape index: {}]
  %s4 = inlined_call_operand.vmem [shape: f32[1,256], index: 4, kind: input, shape index: {}]
  %s5 = inlined_call_operand.vmem [shape: bf16[256,128], index: 5, kind: input, shape index: {}]
  %s6 = inlined_call_operand.vmem [shape: f32[1,128], index: 6, kind: input, shape index: {}]
  %s7 = inlined_call_operand.vmem [shape: f32[128,128], index: 7, kind: output, shape index: {}]
  %s8 = sld [smem:[#allocation0]]
  $region46: #{aaf_gcnconv_forward.5} parent=0
    _
  %s10 = ssub.s32 1, %s8
  %s11 = scalar_select 0, %s10, %s8
  // Predicated region
  $region2: #{aaf_gcnconv_forward.5} parent=0 // pred_check
    _
  $region3: #{aaf_gcnconv_forward.5} parent=0 // pred_check_branch
    %13 = sbr.rel (0) target = $region5
  $region4: #{aaf_gcnconv_forward.5} parent=0 // pred_region
    _
  $region5: #{aaf_gcnconv_forward.5} parent=0 // pred_fallthru
    _
  // Predicated region
  $region6: #{aaf_gcnconv_forward.5} parent=0 // pred_check
    _
  $region7: #{aaf_gcnconv_forward.5} parent=0 // pred_check_branch
    %15 = sbr.rel (0) target = $region9
  $region8: #{aaf_gcnconv_forward.5} parent=0 // pred_region
    _
  $region9: #{aaf_gcnconv_forward.5} parent=0 // pred_fallthru
    _
  // Predicated region
  $region10: #{aaf_gcnconv_forward.5} parent=0 // pred_check
    _
  $region11: #{aaf_gcnconv_forward.5} parent=0 // pred_check_branch
    %17 = sbr.rel (0) target = $region13
  $region12: #{aaf_gcnconv_forward.5} parent=0 // pred_region
    _
  $region13: #{aaf_gcnconv_forward.5} parent=0 // pred_fallthru
    _
  // Predicated region
  $region14: #{aaf_gcnconv_forward.5} parent=0 // pred_check
    _
  $region15: #{aaf_gcnconv_forward.5} parent=0 // pred_check_branch
    %19 = sbr.rel (0) target = $region17
  $region16: #{aaf_gcnconv_forward.5} parent=0 // pred_region
    _
  $region17: #{aaf_gcnconv_forward.5} parent=0 // pred_fallthru
    _
  // Predicated region
  $region18: #{aaf_gcnconv_forward.5} parent=0 // pred_check
    _
  $region19: #{aaf_gcnconv_forward.5} parent=0 // pred_check_branch
    %21 = sbr.rel (0) target = $region21
  $region20: #{aaf_gcnconv_forward.5} parent=0 // pred_region
    _
  $region21: #{aaf_gcnconv_forward.5} parent=0 // pred_fallthru
    _
  // Predicated region
  $region22: #{aaf_gcnconv_forward.5} parent=0 // pred_check
    _
  $region23: #{aaf_gcnconv_forward.5} parent=0 // pred_check_branch
    %23 = sbr.rel (0) target = $region25
  $region24: #{aaf_gcnconv_forward.5} parent=0 // pred_region
    _
  $region25: #{aaf_gcnconv_forward.5} parent=0 // pred_fallthru
    _
  // Predicated region
  $region26: #{aaf_gcnconv_forward.5} parent=0 // pred_check
    _
  $region27: #{aaf_gcnconv_forward.5} parent=0 // pred_check_branch
    %25 = sbr.rel (0) target = $region29
  $region28: #{aaf_gcnconv_forward.5} parent=0 // pred_region
    _
  $region29: #{aaf_gcnconv_forward.5} parent=0 // pred_fallthru
    _
  %p27 = scmp.eq.s32.totalorder 0, 0
  // Predicated region
  $region30: #{aaf_gcnconv_forward.5} parent=0 // pred_check
    %p28 = pneg %p27
  $region31: #{aaf_gcnconv_forward.5} parent=0 // pred_check_branch
    %30 = sbr.rel (%p28) target = $region33
  $region32: #{aaf_gcnconv_forward.5} parent=0 // pred_region
    %31 = vst [vmem:[#allocation2] sm:$0xff] 0.0
    %32 = vst [vmem:[#allocation2 + $0x8] sm:$0xff] 0.0
    %33 = vst [vmem:[#allocation2 + $0x10] sm:$0xff] 0.0
    %34 = vst [vmem:[#allocation2 + $0x18] sm:$0xff] 0.0
    %35 = vst [vmem:[#allocation2 + $0x20] sm:$0xff] 0.0
    %36 = vst [vmem:[#allocation2 + $0x28] sm:$0xff] 0.0
    %37 = vst [vmem:[#allocation2 + $0x30] sm:$0xff] 0.0
    %38 = vst [vmem:[#allocation2 + $0x38] sm:$0xff] 0.0
    %39 = vst [vmem:[#allocation2 + $0x40] sm:$0xff] 0.0
    %40 = vst [vmem:[#allocation2 + $0x48] sm:$0xff] 0.0
    %41 = vst [vmem:[#allocation2 + $0x50] sm:$0xff] 0.0
    %42 = vst [vmem:[#allocation2 + $0x58] sm:$0xff] 0.0
    %43 = vst [vmem:[#allocation2 + $0x60] sm:$0xff] 0.0
    %44 = vst [vmem:[#allocation2 + $0x68] sm:$0xff] 0.0
    %45 = vst [vmem:[#allocation2 + $0x70] sm:$0xff] 0.0
    %46 = vst [vmem:[#allocation2 + $0x78] sm:$0xff] 0.0
    %47 = vst [vmem:[#allocation2 + $0x80] sm:$0xff] 0.0
    %48 = vst [vmem:[#allocation2 + $0x88] sm:$0xff] 0.0
    %49 = vst [vmem:[#allocation2 + $0x90] sm:$0xff] 0.0
    %50 = vst [vmem:[#allocation2 + $0x98] sm:$0xff] 0.0
    %51 = vst [vmem:[#allocation2 + $0xa0] sm:$0xff] 0.0
    %52 = vst [vmem:[#allocation2 + $0xa8] sm:$0xff] 0.0
    %53 = vst [vmem:[#allocation2 + $0xb0] sm:$0xff] 0.0
    %54 = vst [vmem:[#allocation2 + $0xb8] sm:$0xff] 0.0
    %55 = vst [vmem:[#allocation2 + $0xc0] sm:$0xff] 0.0
    %56 = vst [vmem:[#allocation2 + $0xc8] sm:$0xff] 0.0
    %57 = vst [vmem:[#allocation2 + $0xd0] sm:$0xff] 0.0
    %58 = vst [vmem:[#allocation2 + $0xd8] sm:$0xff] 0.0
    %59 = vst [vmem:[#allocation2 + $0xe0] sm:$0xff] 0.0
    %60 = vst [vmem:[#allocation2 + $0xe8] sm:$0xff] 0.0
    %61 = vst [vmem:[#allocation2 + $0xf0] sm:$0xff] 0.0
    %62 = vst [vmem:[#allocation2 + $0xf8] sm:$0xff] 0.0
  $region33: #{aaf_gcnconv_forward.5} parent=0 // pred_fallthru
    _
  %s63 = smul.u32 0, 128
  %s64 = sshra.s32 %s63, 3
  %s65 = sand.u32 %s63, 7
  %s66 = smul.u32 %s64, 2
  %s67 = smul.addr %s66, 4
  %s68 = scalar_lea.vmem %s1, %s67
  %v69 = vld [vmem:[%s68] sm:$0xff]
  %v70 = vld [vmem:[%s68 + $0x8] sm:$0xff]
  %v71 = vld [vmem:[%s68 + $0x10] sm:$0xff]
  %v72 = vld [vmem:[%s68 + $0x18] sm:$0xff]
  %v73 = vld [vmem:[%s68 + $0x20] sm:$0xff]
  %v74 = vld [vmem:[%s68 + $0x28] sm:$0xff]
  %v75 = vld [vmem:[%s68 + $0x30] sm:$0xff]
  %v76 = vld [vmem:[%s68 + $0x38] sm:$0xff]
  %v77 = vld [vmem:[%s68 + $0x40] sm:$0xff]
  %v78 = vld [vmem:[%s68 + $0x48] sm:$0xff]
  %v79 = vld [vmem:[%s68 + $0x50] sm:$0xff]
  %v80 = vld [vmem:[%s68 + $0x58] sm:$0xff]
  %v81 = vld [vmem:[%s68 + $0x60] sm:$0xff]
  %v82 = vld [vmem:[%s68 + $0x68] sm:$0xff]
  %v83 = vld [vmem:[%s68 + $0x70] sm:$0xff]
  %v84 = vld [vmem:[%s68 + $0x78] sm:$0xff]
  %v85 = vld [vmem:[#allocation2] sm:$0xff]
  %v86 = vld [vmem:[#allocation2 + $0x8] sm:$0xff]
  %v87 = vld [vmem:[#allocation2 + $0x10] sm:$0xff]
  %v88 = vld [vmem:[#allocation2 + $0x18] sm:$0xff]
  %v89 = vld [vmem:[#allocation2 + $0x20] sm:$0xff]
  %v90 = vld [vmem:[#allocation2 + $0x28] sm:$0xff]
  %v91 = vld [vmem:[#allocation2 + $0x30] sm:$0xff]
  %v92 = vld [vmem:[#allocation2 + $0x38] sm:$0xff]
  %v93 = vld [vmem:[#allocation2 + $0x40] sm:$0xff]
  %v94 = vld [vmem:[#allocation2 + $0x48] sm:$0xff]
  %v95 = vld [vmem:[#allocation2 + $0x50] sm:$0xff]
  %v96 = vld [vmem:[#allocation2 + $0x58] sm:$0xff]
  %v97 = vld [vmem:[#allocation2 + $0x60] sm:$0xff]
  %v98 = vld [vmem:[#allocation2 + $0x68] sm:$0xff]
  %v99 = vld [vmem:[#allocation2 + $0x70] sm:$0xff]
  %v100 = vld [vmem:[#allocation2 + $0x78] sm:$0xff]
  %v101 = vld [vmem:[#allocation2 + $0x80] sm:$0xff]
  %v102 = vld [vmem:[#allocation2 + $0x88] sm:$0xff]
  %v103 = vld [vmem:[#allocation2 + $0x90] sm:$0xff]
  %v104 = vld [vmem:[#allocation2 + $0x98] sm:$0xff]
  %v105 = vld [vmem:[#allocation2 + $0xa0] sm:$0xff]
  %v106 = vld [vmem:[#allocation2 + $0xa8] sm:$0xff]
  %v107 = vld [vmem:[#allocation2 + $0xb0] sm:$0xff]
  %v108 = vld [vmem:[#allocation2 + $0xb8] sm:$0xff]
  %v109 = vld [vmem:[#allocation2 + $0xc0] sm:$0xff]
  %v110 = vld [vmem:[#allocation2 + $0xc8] sm:$0xff]
  %v111 = vld [vmem:[#allocation2 + $0xd0] sm:$0xff]
  %v112 = vld [vmem:[#allocation2 + $0xd8] sm:$0xff]
  %v113 = vld [vmem:[#allocation2 + $0xe0] sm:$0xff]
  %v114 = vld [vmem:[#allocation2 + $0xe8] sm:$0xff]
  %v115 = vld [vmem:[#allocation2 + $0xf0] sm:$0xff]
  %v116 = vld [vmem:[#allocation2 + $0xf8] sm:$0xff]
  %v117 = vld [vmem:[%s0] sm:$0xf]
  %v118 = vld [vmem:[%s0 + $0x4] sm:$0xf]
  %v119 = vld [vmem:[%s0 + $0x8] sm:$0xf]
  %v120 = vld [vmem:[%s0 + $0xc] sm:$0xf]
  %v121 = vld [vmem:[%s0 + $0x10] sm:$0xf]
  %v122 = vld [vmem:[%s0 + $0x14] sm:$0xf]
  %v123 = vld [vmem:[%s0 + $0x18] sm:$0xf]
  %v124 = vld [vmem:[%s0 + $0x1c] sm:$0xf]
  %v125 = vld [vmem:[%s0 + $0x20] sm:$0xf]
  %v126 = vld [vmem:[%s0 + $0x24] sm:$0xf]
  %v127 = vld [vmem:[%s0 + $0x28] sm:$0xf]
  %v128 = vld [vmem:[%s0 + $0x2c] sm:$0xf]
  %v129 = vld [vmem:[%s0 + $0x30] sm:$0xf]
  %v130 = vld [vmem:[%s0 + $0x34] sm:$0xf]
  %v131 = vld [vmem:[%s0 + $0x38] sm:$0xf]
  %v132 = vld [vmem:[%s0 + $0x3c] sm:$0xf]
  %v149 = vunpack.c.l.b16 %v117
  %v150 = vunpack.c.l.b16 %v118
  %v151 = vunpack.c.l.b16 %v119
  %v152 = vunpack.c.l.b16 %v120
  %v153 = vunpack.c.l.b16 %v121
  %v154 = vunpack.c.l.b16 %v122
  %v155 = vunpack.c.l.b16 %v123
  %v156 = vunpack.c.l.b16 %v124
  %v157 = vunpack.c.l.b16 %v125
  %v158 = vunpack.c.l.b16 %v126
  %v159 = vunpack.c.l.b16 %v127
  %v160 = vunpack.c.l.b16 %v128
  %v161 = vunpack.c.l.b16 %v129
  %v162 = vunpack.c.l.b16 %v130
  %v163 = vunpack.c.l.b16 %v131
  %v164 = vunpack.c.l.b16 %v132
  %v165 = vpack.c.b16 %v150, %v149
  %v166 = vpack.c.b16 %v152, %v151
  %v167 = vpack.c.b16 %v154, %v153
  %v168 = vpack.c.b16 %v156, %v155
  %v169 = vpack.c.b16 %v158, %v157
  %v170 = vpack.c.b16 %v160, %v159
  %v171 = vpack.c.b16 %v162, %v161
  %v172 = vpack.c.b16 %v164, %v163
  %v197 = vunpack.c.l.b16 %v69
  %v198 = vunpack.c.h.b16 %v69
  %v199 = vunpack.c.l.b16 %v70
  %v200 = vunpack.c.h.b16 %v70
  %v201 = vunpack.c.l.b16 %v71
  %v202 = vunpack.c.h.b16 %v71
  %v203 = vunpack.c.l.b16 %v72
  %v204 = vunpack.c.h.b16 %v72
  %v205 = vunpack.c.l.b16 %v73
  %v206 = vunpack.c.h.b16 %v73
  %v207 = vunpack.c.l.b16 %v74
  %v208 = vunpack.c.h.b16 %v74
  %v209 = vunpack.c.l.b16 %v75
  %v210 = vunpack.c.h.b16 %v75
  %v211 = vunpack.c.l.b16 %v76
  %v212 = vunpack.c.h.b16 %v76
  %v213 = vunpack.c.l.b16 %v77
  %v214 = vunpack.c.h.b16 %v77
  %v215 = vunpack.c.l.b16 %v78
  %v216 = vunpack.c.h.b16 %v78
  %v217 = vunpack.c.l.b16 %v79
  %v218 = vunpack.c.h.b16 %v79
  %v219 = vunpack.c.l.b16 %v80
  %v220 = vunpack.c.h.b16 %v80
  %v221 = vunpack.c.l.b16 %v81
  %v222 = vunpack.c.h.b16 %v81
  %v223 = vunpack.c.l.b16 %v82
  %v224 = vunpack.c.h.b16 %v82
  %v225 = vunpack.c.l.b16 %v83
  %v226 = vunpack.c.h.b16 %v83
  %v227 = vunpack.c.l.b16 %v84
  %v228 = vunpack.c.h.b16 %v84
  %v229 = vpack.c.b16 %v199, %v197
  %v230 = vpack.c.b16 %v200, %v198
  %v231 = vpack.c.b16 %v203, %v201
  %v232 = vpack.c.b16 %v204, %v202
  %v233 = vpack.c.b16 %v207, %v205
  %v234 = vpack.c.b16 %v208, %v206
  %v235 = vpack.c.b16 %v211, %v209
  %v236 = vpack.c.b16 %v212, %v210
  %v237 = vpack.c.b16 %v215, %v213
  %v238 = vpack.c.b16 %v216, %v214
  %v239 = vpack.c.b16 %v219, %v217
  %v240 = vpack.c.b16 %v220, %v218
  %v241 = vpack.c.b16 %v223, %v221
  %v242 = vpack.c.b16 %v224, %v222
  %v243 = vpack.c.b16 %v227, %v225
  %v244 = vpack.c.b16 %v228, %v226
  %261 = vmatprep.subr.bf16.mxu0 %v244
  %262 = vmatpush1.bf16.msra.mxu0 %v243
  %263 = vmatprep.subr.bf16.mxu0 %v242
  %264 = vmatpush1.bf16.msra.mxu0 %v241
  %265 = vmatprep.subr.bf16.mxu0 %v240
  %266 = vmatpush1.bf16.msra.mxu0 %v239
  %267 = vmatprep.subr.bf16.mxu0 %v238
  %268 = vmatpush1.bf16.msra.mxu0 %v237
  %269 = vmatprep.subr.bf16.mxu0 %v236
  %270 = vmatpush1.bf16.msra.mxu0 %v235
  %271 = vmatprep.subr.bf16.mxu0 %v234
  %272 = vmatpush1.bf16.msra.mxu0 %v233
  %273 = vmatprep.subr.bf16.mxu0 %v232
  %274 = vmatpush1.bf16.msra.mxu0 %v231
  %275 = vmatprep.subr.bf16.mxu0 %v230
  %276 = vmatpush1.bf16.msra.mxu0 %v229
  %277 = vmatprep.subr.bf16.mxu0 0
  %278 = vmatpush2.bf16.msra.mxu0 0
  %279 = vmatprep.subr.bf16.mxu0 0
  %280 = vmatpush2.bf16.msra.mxu0 0
  %281 = vmatprep.subr.bf16.mxu0 0
  %282 = vmatpush2.bf16.msra.mxu0 0
  %283 = vmatprep.subr.bf16.mxu0 0
  %284 = vmatpush2.bf16.msra.mxu0 0
  %285 = vmatprep.subr.bf16.mxu0 0
  %286 = vmatpush2.bf16.msra.mxu0 0
  %287 = vmatprep.subr.bf16.mxu0 0
  %288 = vmatpush2.bf16.msra.mxu0 0
  %289 = vmatprep.subr.bf16.mxu0 0
  %290 = vmatpush2.bf16.msra.mxu0 0
  %291 = vmatprep.subr.bf16.mxu0 0
  %292 = vmatpush2.bf16.msra.mxu0 0
  %293 = vmatprep.mubr.bf16.mxu0 0
  %294 = vmatmul.mubr.bf16.gmra.mxu0 %v165
  %v295 = vpop.f32.mrf.mxu0
  %v296 = vadd.f32 0.0, %v295
  %v297 = vpop.f32.mrf.mxu0
  %v298 = vadd.f32 0.0, %v297
  %v299 = vpop.f32.mrf.mxu0
  %v300 = vadd.f32 0.0, %v299
  %v301 = vpop.f32.mrf.mxu0
  %v302 = vadd.f32 0.0, %v301
  %303 = vmatprep.mubr.bf16.mxu0 0
  %304 = vmatmul.mubr.bf16.gmra.mxu0 %v166
  %v305 = vpop.f32.mrf.mxu0
  %v306 = vadd.f32 0.0, %v305
  %v307 = vpop.f32.mrf.mxu0
  %v308 = vadd.f32 0.0, %v307
  %v309 = vpop.f32.mrf.mxu0
  %v310 = vadd.f32 0.0, %v309
  %v311 = vpop.f32.mrf.mxu0
  %v312 = vadd.f32 0.0, %v311
  %313 = vmatprep.mubr.bf16.mxu0 0
  %314 = vmatmul.mubr.bf16.gmra.mxu0 %v167
  %v315 = vpop.f32.mrf.mxu0
  %v316 = vadd.f32 0.0, %v315
  %v317 = vpop.f32.mrf.mxu0
  %v318 = vadd.f32 0.0, %v317
  %v319 = vpop.f32.mrf.mxu0
  %v320 = vadd.f32 0.0, %v319
  %v321 = vpop.f32.mrf.mxu0
  %v322 = vadd.f32 0.0, %v321
  %323 = vmatprep.mubr.bf16.mxu0 0
  %324 = vmatmul.mubr.bf16.gmra.mxu0 %v168
  %v325 = vpop.f32.mrf.mxu0
  %v326 = vadd.f32 0.0, %v325
  %v327 = vpop.f32.mrf.mxu0
  %v328 = vadd.f32 0.0, %v327
  %v329 = vpop.f32.mrf.mxu0
  %v330 = vadd.f32 0.0, %v329
  %v331 = vpop.f32.mrf.mxu0
  %v332 = vadd.f32 0.0, %v331
  %333 = vmatprep.mubr.bf16.mxu0 0
  %334 = vmatmul.mubr.bf16.gmra.mxu0 %v169
  %v335 = vpop.f32.mrf.mxu0
  %v336 = vadd.f32 0.0, %v335
  %v337 = vpop.f32.mrf.mxu0
  %v338 = vadd.f32 0.0, %v337
  %v339 = vpop.f32.mrf.mxu0
  %v340 = vadd.f32 0.0, %v339
  %v341 = vpop.f32.mrf.mxu0
  %v342 = vadd.f32 0.0, %v341
  %343 = vmatprep.mubr.bf16.mxu0 0
  %344 = vmatmul.mubr.bf16.gmra.mxu0 %v170
  %v345 = vpop.f32.mrf.mxu0
  %v346 = vadd.f32 0.0, %v345
  %v347 = vpop.f32.mrf.mxu0
  %v348 = vadd.f32 0.0, %v347
  %v349 = vpop.f32.mrf.mxu0
  %v350 = vadd.f32 0.0, %v349
  %v351 = vpop.f32.mrf.mxu0
  %v352 = vadd.f32 0.0, %v351
  %353 = vmatprep.mubr.bf16.mxu0 0
  %354 = vmatmul.mubr.bf16.gmra.mxu0 %v171
  %v355 = vpop.f32.mrf.mxu0
  %v356 = vadd.f32 0.0, %v355
  %v357 = vpop.f32.mrf.mxu0
  %v358 = vadd.f32 0.0, %v357
  %v359 = vpop.f32.mrf.mxu0
  %v360 = vadd.f32 0.0, %v359
  %v361 = vpop.f32.mrf.mxu0
  %v362 = vadd.f32 0.0, %v361
  %363 = vmatprep.mubr.bf16.mxu0 0
  %364 = vmatmul.mubr.bf16.gmra.mxu0 %v172
  %v365 = vpop.f32.mrf.mxu0
  %v366 = vadd.f32 0.0, %v365
  %v367 = vpop.f32.mrf.mxu0
  %v368 = vadd.f32 0.0, %v367
  %v369 = vpop.f32.mrf.mxu0
  %v370 = vadd.f32 0.0, %v369
  %v371 = vpop.f32.mrf.mxu0
  %v372 = vadd.f32 0.0, %v371
  %373 = vdwg.mxu0
  %v374 = vadd.f32 %v85, %v296
  %v375 = vadd.f32 %v86, %v298
  %v376 = vadd.f32 %v87, %v300
  %v377 = vadd.f32 %v88, %v302
  %v378 = vadd.f32 %v89, %v306
  %v379 = vadd.f32 %v90, %v308
  %v380 = vadd.f32 %v91, %v310
  %v381 = vadd.f32 %v92, %v312
  %v382 = vadd.f32 %v93, %v316
  %v383 = vadd.f32 %v94, %v318
  %v384 = vadd.f32 %v95, %v320
  %v385 = vadd.f32 %v96, %v322
  %v386 = vadd.f32 %v97, %v326
  %v387 = vadd.f32 %v98, %v328
  %v388 = vadd.f32 %v99, %v330
  %v389 = vadd.f32 %v100, %v332
  %v390 = vadd.f32 %v101, %v336
  %v391 = vadd.f32 %v102, %v338
  %v392 = vadd.f32 %v103, %v340
  %v393 = vadd.f32 %v104, %v342
  %v394 = vadd.f32 %v105, %v346
  %v395 = vadd.f32 %v106, %v348
  %v396 = vadd.f32 %v107, %v350
  %v397 = vadd.f32 %v108, %v352
  %v398 = vadd.f32 %v109, %v356
  %v399 = vadd.f32 %v110, %v358
  %v400 = vadd.f32 %v111, %v360
  %v401 = vadd.f32 %v112, %v362
  %v402 = vadd.f32 %v113, %v366
  %v403 = vadd.f32 %v114, %v368
  %v404 = vadd.f32 %v115, %v370
  %v405 = vadd.f32 %v116, %v372
  %406 = vst [vmem:[#allocation2] sm:$0xff] %v374
  %407 = vst [vmem:[#allocation2 + $0x8] sm:$0xff] %v375
  %408 = vst [vmem:[#allocation2 + $0x10] sm:$0xff] %v376
  %409 = vst [vmem:[#allocation2 + $0x18] sm:$0xff] %v377
  %410 = vst [vmem:[#allocation2 + $0x20] sm:$0xff] %v378
  %411 = vst [vmem:[#allocation2 + $0x28] sm:$0xff] %v379
  %412 = vst [vmem:[#allocation2 + $0x30] sm:$0xff] %v380
  %413 = vst [vmem:[#allocation2 + $0x38] sm:$0xff] %v381
  %414 = vst [vmem:[#allocation2 + $0x40] sm:$0xff] %v382
  %415 = vst [vmem:[#allocation2 + $0x48] sm:$0xff] %v383
  %416 = vst [vmem:[#allocation2 + $0x50] sm:$0xff] %v384
  %417 = vst [vmem:[#allocation2 + $0x58] sm:$0xff] %v385
  %418 = vst [vmem:[#allocation2 + $0x60] sm:$0xff] %v386
  %419 = vst [vmem:[#allocation2 + $0x68] sm:$0xff] %v387
  %420 = vst [vmem:[#allocation2 + $0x70] sm:$0xff] %v388
  %421 = vst [vmem:[#allocation2 + $0x78] sm:$0xff] %v389
  %422 = vst [vmem:[#allocation2 + $0x80] sm:$0xff] %v390
  %423 = vst [vmem:[#allocation2 + $0x88] sm:$0xff] %v391
  %424 = vst [vmem:[#allocation2 + $0x90] sm:$0xff] %v392
  %425 = vst [vmem:[#allocation2 + $0x98] sm:$0xff] %v393
  %426 = vst [vmem:[#allocation2 + $0xa0] sm:$0xff] %v394
  %427 = vst [vmem:[#allocation2 + $0xa8] sm:$0xff] %v395
  %428 = vst [vmem:[#allocation2 + $0xb0] sm:$0xff] %v396
  %429 = vst [vmem:[#allocation2 + $0xb8] sm:$0xff] %v397
  %430 = vst [vmem:[#allocation2 + $0xc0] sm:$0xff] %v398
  %431 = vst [vmem:[#allocation2 + $0xc8] sm:$0xff] %v399
  %432 = vst [vmem:[#allocation2 + $0xd0] sm:$0xff] %v400
  %433 = vst [vmem:[#allocation2 + $0xd8] sm:$0xff] %v401
  %434 = vst [vmem:[#allocation2 + $0xe0] sm:$0xff] %v402
  %435 = vst [vmem:[#allocation2 + $0xe8] sm:$0xff] %v403
  %436 = vst [vmem:[#allocation2 + $0xf0] sm:$0xff] %v404
  %437 = vst [vmem:[#allocation2 + $0xf8] sm:$0xff] %v405
  // Predicated region
  $region34: #{aaf_gcnconv_forward.5} parent=0 // pred_check
    %p438 = pneg %p27
  $region35: #{aaf_gcnconv_forward.5} parent=0 // pred_check_branch
    %440 = sbr.rel (%p438) target = $region37
  $region36: #{aaf_gcnconv_forward.5} parent=0 // pred_region
    %v441 = vld [vmem:[#allocation2] sm:$0xff]
    %v442 = vld [vmem:[#allocation2 + $0x8] sm:$0xff]
    %v443 = vld [vmem:[#allocation2 + $0x10] sm:$0xff]
    %v444 = vld [vmem:[#allocation2 + $0x18] sm:$0xff]
    %v445 = vld [vmem:[#allocation2 + $0x20] sm:$0xff]
    %v446 = vld [vmem:[#allocation2 + $0x28] sm:$0xff]
    %v447 = vld [vmem:[#allocation2 + $0x30] sm:$0xff]
    %v448 = vld [vmem:[#allocation2 + $0x38] sm:$0xff]
    %v449 = vld [vmem:[#allocation2 + $0x40] sm:$0xff]
    %v450 = vld [vmem:[#allocation2 + $0x48] sm:$0xff]
    %v451 = vld [vmem:[#allocation2 + $0x50] sm:$0xff]
    %v452 = vld [vmem:[#allocation2 + $0x58] sm:$0xff]
    %v453 = vld [vmem:[#allocation2 + $0x60] sm:$0xff]
    %v454 = vld [vmem:[#allocation2 + $0x68] sm:$0xff]
    %v455 = vld [vmem:[#allocation2 + $0x70] sm:$0xff]
    %v456 = vld [vmem:[#allocation2 + $0x78] sm:$0xff]
    %v457 = vld [vmem:[#allocation2 + $0x80] sm:$0xff]
    %v458 = vld [vmem:[#allocation2 + $0x88] sm:$0xff]
    %v459 = vld [vmem:[#allocation2 + $0x90] sm:$0xff]
    %v460 = vld [vmem:[#allocation2 + $0x98] sm:$0xff]
    %v461 = vld [vmem:[#allocation2 + $0xa0] sm:$0xff]
    %v462 = vld [vmem:[#allocation2 + $0xa8] sm:$0xff]
    %v463 = vld [vmem:[#allocation2 + $0xb0] sm:$0xff]
    %v464 = vld [vmem:[#allocation2 + $0xb8] sm:$0xff]
    %v465 = vld [vmem:[#allocation2 + $0xc0] sm:$0xff]
    %v466 = vld [vmem:[#allocation2 + $0xc8] sm:$0xff]
    %v467 = vld [vmem:[#allocation2 + $0xd0] sm:$0xff]
    %v468 = vld [vmem:[#allocation2 + $0xd8] sm:$0xff]
    %v469 = vld [vmem:[#allocation2 + $0xe0] sm:$0xff]
    %v470 = vld [vmem:[#allocation2 + $0xe8] sm:$0xff]
    %v471 = vld [vmem:[#allocation2 + $0xf0] sm:$0xff]
    %v472 = vld [vmem:[#allocation2 + $0xf8] sm:$0xff]
    %v473 = vld [vmem:[%s2] sm:$0x3]
    %v475 = vlaneseq
    %v476 = vshrl.u32 %v475, 7
    %v477 = vsub.s32 0, %v476
    %v478 = vrot.slane %v473, %v477
    %v479 = vlaneseq
    %v480 = vshrl.u32 %v479, 7
    %v481 = vsub.s32 1, %v480
    %v482 = vrot.slane %v473, %v481
    %v485 = vadd.f32 %v441, %v478
    %v486 = vadd.f32 %v442, %v482
    %v487 = vadd.f32 %v443, %v478
    %v488 = vadd.f32 %v444, %v482
    %v489 = vadd.f32 %v445, %v478
    %v490 = vadd.f32 %v446, %v482
    %v491 = vadd.f32 %v447, %v478
    %v492 = vadd.f32 %v448, %v482
    %v493 = vadd.f32 %v449, %v478
    %v494 = vadd.f32 %v450, %v482
    %v495 = vadd.f32 %v451, %v478
    %v496 = vadd.f32 %v452, %v482
    %v497 = vadd.f32 %v453, %v478
    %v498 = vadd.f32 %v454, %v482
    %v499 = vadd.f32 %v455, %v478
    %v500 = vadd.f32 %v456, %v482
    %v501 = vadd.f32 %v457, %v478
    %v502 = vadd.f32 %v458, %v482
    %v503 = vadd.f32 %v459, %v478
    %v504 = vadd.f32 %v460, %v482
    %v505 = vadd.f32 %v461, %v478
    %v506 = vadd.f32 %v462, %v482
    %v507 = vadd.f32 %v463, %v478
    %v508 = vadd.f32 %v464, %v482
    %v509 = vadd.f32 %v465, %v478
    %v510 = vadd.f32 %v466, %v482
    %v511 = vadd.f32 %v467, %v478
    %v512 = vadd.f32 %v468, %v482
    %v513 = vadd.f32 %v469, %v478
    %v514 = vadd.f32 %v470, %v482
    %v515 = vadd.f32 %v471, %v478
    %v516 = vadd.f32 %v472, %v482
    %v517 = vmax.f32 %v485, 0.0
    %v518 = vmax.f32 %v486, 0.0
    %v519 = vmax.f32 %v487, 0.0
    %v520 = vmax.f32 %v488, 0.0
    %v521 = vmax.f32 %v489, 0.0
    %v522 = vmax.f32 %v490, 0.0
    %v523 = vmax.f32 %v491, 0.0
    %v524 = vmax.f32 %v492, 0.0
    %v525 = vmax.f32 %v493, 0.0
    %v526 = vmax.f32 %v494, 0.0
    %v527 = vmax.f32 %v495, 0.0
    %v528 = vmax.f32 %v496, 0.0
    %v529 = vmax.f32 %v497, 0.0
    %v530 = vmax.f32 %v498, 0.0
    %v531 = vmax.f32 %v499, 0.0
    %v532 = vmax.f32 %v500, 0.0
    %v533 = vmax.f32 %v501, 0.0
    %v534 = vmax.f32 %v502, 0.0
    %v535 = vmax.f32 %v503, 0.0
    %v536 = vmax.f32 %v504, 0.0
    %v537 = vmax.f32 %v505, 0.0
    %v538 = vmax.f32 %v506, 0.0
    %v539 = vmax.f32 %v507, 0.0
    %v540 = vmax.f32 %v508, 0.0
    %v541 = vmax.f32 %v509, 0.0
    %v542 = vmax.f32 %v510, 0.0
    %v543 = vmax.f32 %v511, 0.0
    %v544 = vmax.f32 %v512, 0.0
    %v545 = vmax.f32 %v513, 0.0
    %v546 = vmax.f32 %v514, 0.0
    %v547 = vmax.f32 %v515, 0.0
    %v548 = vmax.f32 %v516, 0.0
    %v549 = vpack.c.bf16 %v519, %v517
    %v550 = vpack.c.bf16 %v520, %v518
    %v551 = vpack.c.bf16 %v523, %v521
    %v552 = vpack.c.bf16 %v524, %v522
    %v553 = vpack.c.bf16 %v527, %v525
    %v554 = vpack.c.bf16 %v528, %v526
    %v555 = vpack.c.bf16 %v531, %v529
    %v556 = vpack.c.bf16 %v532, %v530
    %v557 = vpack.c.bf16 %v535, %v533
    %v558 = vpack.c.bf16 %v536, %v534
    %v559 = vpack.c.bf16 %v539, %v537
    %v560 = vpack.c.bf16 %v540, %v538
    %v561 = vpack.c.bf16 %v543, %v541
    %v562 = vpack.c.bf16 %v544, %v542
    %v563 = vpack.c.bf16 %v547, %v545
    %v564 = vpack.c.bf16 %v548, %v546
    %v565 = vld [vmem:[%s3] sm:$0xff]
    %v566 = vld [vmem:[%s3 + $0x8] sm:$0xff]
    %v567 = vld [vmem:[%s3 + $0x10] sm:$0xff]
    %v568 = vld [vmem:[%s3 + $0x18] sm:$0xff]
    %v569 = vld [vmem:[%s3 + $0x20] sm:$0xff]
    %v570 = vld [vmem:[%s3 + $0x28] sm:$0xff]
    %v571 = vld [vmem:[%s3 + $0x30] sm:$0xff]
    %v572 = vld [vmem:[%s3 + $0x38] sm:$0xff]
    %v573 = vld [vmem:[%s3 + $0x40] sm:$0xff]
    %v574 = vld [vmem:[%s3 + $0x48] sm:$0xff]
    %v575 = vld [vmem:[%s3 + $0x50] sm:$0xff]
    %v576 = vld [vmem:[%s3 + $0x58] sm:$0xff]
    %v577 = vld [vmem:[%s3 + $0x60] sm:$0xff]
    %v578 = vld [vmem:[%s3 + $0x68] sm:$0xff]
    %v579 = vld [vmem:[%s3 + $0x70] sm:$0xff]
    %v580 = vld [vmem:[%s3 + $0x78] sm:$0xff]
    %v581 = vld [vmem:[%s3 + $0x80] sm:$0xff]
    %v582 = vld [vmem:[%s3 + $0x88] sm:$0xff]
    %v583 = vld [vmem:[%s3 + $0x90] sm:$0xff]
    %v584 = vld [vmem:[%s3 + $0x98] sm:$0xff]
    %v585 = vld [vmem:[%s3 + $0xa0] sm:$0xff]
    %v586 = vld [vmem:[%s3 + $0xa8] sm:$0xff]
    %v587 = vld [vmem:[%s3 + $0xb0] sm:$0xff]
    %v588 = vld [vmem:[%s3 + $0xb8] sm:$0xff]
    %v589 = vld [vmem:[%s3 + $0xc0] sm:$0xff]
    %v590 = vld [vmem:[%s3 + $0xc8] sm:$0xff]
    %v591 = vld [vmem:[%s3 + $0xd0] sm:$0xff]
    %v592 = vld [vmem:[%s3 + $0xd8] sm:$0xff]
    %v593 = vld [vmem:[%s3 + $0xe0] sm:$0xff]
    %v594 = vld [vmem:[%s3 + $0xe8] sm:$0xff]
    %v595 = vld [vmem:[%s3 + $0xf0] sm:$0xff]
    %v596 = vld [vmem:[%s3 + $0xf8] sm:$0xff]
    %v597 = vld [vmem:[%s4] sm:$0x3]
    %v599 = vlaneseq
    %v600 = vshrl.u32 %v599, 7
    %v601 = vsub.s32 0, %v600
    %v602 = vrot.slane %v597, %v601
    %v603 = vlaneseq
    %v604 = vshrl.u32 %v603, 7
    %v605 = vsub.s32 1, %v604
    %v606 = vrot.slane %v597, %v605
    %v641 = vunpack.c.l.b16 %v565
    %v642 = vunpack.c.h.b16 %v565
    %v643 = vunpack.c.l.b16 %v566
    %v644 = vunpack.c.h.b16 %v566
    %v645 = vunpack.c.l.b16 %v567
    %v646 = vunpack.c.h.b16 %v567
    %v647 = vunpack.c.l.b16 %v568
    %v648 = vunpack.c.h.b16 %v568
    %v649 = vunpack.c.l.b16 %v569
    %v650 = vunpack.c.h.b16 %v569
    %v651 = vunpack.c.l.b16 %v570
    %v652 = vunpack.c.h.b16 %v570
    %v653 = vunpack.c.l.b16 %v571
    %v654 = vunpack.c.h.b16 %v571
    %v655 = vunpack.c.l.b16 %v572
    %v656 = vunpack.c.h.b16 %v572
    %v657 = vunpack.c.l.b16 %v573
    %v658 = vunpack.c.h.b16 %v573
    %v659 = vunpack.c.l.b16 %v574
    %v660 = vunpack.c.h.b16 %v574
    %v661 = vunpack.c.l.b16 %v575
    %v662 = vunpack.c.h.b16 %v575
    %v663 = vunpack.c.l.b16 %v576
    %v664 = vunpack.c.h.b16 %v576
    %v665 = vunpack.c.l.b16 %v577
    %v666 = vunpack.c.h.b16 %v577
    %v667 = vunpack.c.l.b16 %v578
    %v668 = vunpack.c.h.b16 %v578
    %v669 = vunpack.c.l.b16 %v579
    %v670 = vunpack.c.h.b16 %v579
    %v671 = vunpack.c.l.b16 %v580
    %v672 = vunpack.c.h.b16 %v580
    %v673 = vunpack.c.l.b16 %v581
    %v674 = vunpack.c.h.b16 %v581
    %v675 = vunpack.c.l.b16 %v582
    %v676 = vunpack.c.h.b16 %v582
    %v677 = vunpack.c.l.b16 %v583
    %v678 = vunpack.c.h.b16 %v583
    %v679 = vunpack.c.l.b16 %v584
    %v680 = vunpack.c.h.b16 %v584
    %v681 = vunpack.c.l.b16 %v585
    %v682 = vunpack.c.h.b16 %v585
    %v683 = vunpack.c.l.b16 %v586
    %v684 = vunpack.c.h.b16 %v586
    %v685 = vunpack.c.l.b16 %v587
    %v686 = vunpack.c.h.b16 %v587
    %v687 = vunpack.c.l.b16 %v588
    %v688 = vunpack.c.h.b16 %v588
    %v689 = vunpack.c.l.b16 %v589
    %v690 = vunpack.c.h.b16 %v589
    %v691 = vunpack.c.l.b16 %v590
    %v692 = vunpack.c.h.b16 %v590
    %v693 = vunpack.c.l.b16 %v591
    %v694 = vunpack.c.h.b16 %v591
    %v695 = vunpack.c.l.b16 %v592
    %v696 = vunpack.c.h.b16 %v592
    %v697 = vunpack.c.l.b16 %v593
    %v698 = vunpack.c.h.b16 %v593
    %v699 = vunpack.c.l.b16 %v594
    %v700 = vunpack.c.h.b16 %v594
    %v701 = vunpack.c.l.b16 %v595
    %v702 = vunpack.c.h.b16 %v595
    %v703 = vunpack.c.l.b16 %v596
    %v704 = vunpack.c.h.b16 %v596
    %v705 = vpack.c.b16 %v643, %v641
    %v706 = vpack.c.b16 %v644, %v642
    %v707 = vpack.c.b16 %v647, %v645
    %v708 = vpack.c.b16 %v648, %v646
    %v709 = vpack.c.b16 %v651, %v649
    %v710 = vpack.c.b16 %v652, %v650
    %v711 = vpack.c.b16 %v655, %v653
    %v712 = vpack.c.b16 %v656, %v654
    %v713 = vpack.c.b16 %v659, %v657
    %v714 = vpack.c.b16 %v660, %v658
    %v715 = vpack.c.b16 %v663, %v661
    %v716 = vpack.c.b16 %v664, %v662
    %v717 = vpack.c.b16 %v667, %v665
    %v718 = vpack.c.b16 %v668, %v666
    %v719 = vpack.c.b16 %v671, %v669
    %v720 = vpack.c.b16 %v672, %v670
    %v721 = vpack.c.b16 %v675, %v673
    %v722 = vpack.c.b16 %v676, %v674
    %v723 = vpack.c.b16 %v679, %v677
    %v724 = vpack.c.b16 %v680, %v678
    %v725 = vpack.c.b16 %v683, %v681
    %v726 = vpack.c.b16 %v684, %v682
    %v727 = vpack.c.b16 %v687, %v685
    %v728 = vpack.c.b16 %v688, %v686
    %v729 = vpack.c.b16 %v691, %v689
    %v730 = vpack.c.b16 %v692, %v690
    %v731 = vpack.c.b16 %v695, %v693
    %v732 = vpack.c.b16 %v696, %v694
    %v733 = vpack.c.b16 %v699, %v697
    %v734 = vpack.c.b16 %v700, %v698
    %v735 = vpack.c.b16 %v703, %v701
    %v736 = vpack.c.b16 %v704, %v702
    %769 = vmatprep.subr.bf16.mxu0 %v720
    %770 = vmatpush1.bf16.msra.mxu0 %v719
    %771 = vmatprep.subr.bf16.mxu0 %v718
    %772 = vmatpush1.bf16.msra.mxu0 %v717
    %773 = vmatprep.subr.bf16.mxu0 %v716
    %774 = vmatpush1.bf16.msra.mxu0 %v715
    %775 = vmatprep.subr.bf16.mxu0 %v714
    %776 = vmatpush1.bf16.msra.mxu0 %v713
    %777 = vmatprep.subr.bf16.mxu0 %v712
    %778 = vmatpush1.bf16.msra.mxu0 %v711
    %779 = vmatprep.subr.bf16.mxu0 %v710
    %780 = vmatpush1.bf16.msra.mxu0 %v709
    %781 = vmatprep.subr.bf16.mxu0 %v708
    %782 = vmatpush1.bf16.msra.mxu0 %v707
    %783 = vmatprep.subr.bf16.mxu0 %v706
    %784 = vmatpush1.bf16.msra.mxu0 %v705
    %785 = vmatprep.subr.bf16.mxu0 %v736
    %786 = vmatpush2.bf16.msra.mxu0 %v735
    %787 = vmatprep.subr.bf16.mxu0 %v734
    %788 = vmatpush2.bf16.msra.mxu0 %v733
    %789 = vmatprep.subr.bf16.mxu0 %v732
    %790 = vmatpush2.bf16.msra.mxu0 %v731
    %791 = vmatprep.subr.bf16.mxu0 %v730
    %792 = vmatpush2.bf16.msra.mxu0 %v729
    %793 = vmatprep.subr.bf16.mxu0 %v728
    %794 = vmatpush2.bf16.msra.mxu0 %v727
    %795 = vmatprep.subr.bf16.mxu0 %v726
    %796 = vmatpush2.bf16.msra.mxu0 %v725
    %797 = vmatprep.subr.bf16.mxu0 %v724
    %798 = vmatpush2.bf16.msra.mxu0 %v723
    %799 = vmatprep.subr.bf16.mxu0 %v722
    %800 = vmatpush2.bf16.msra.mxu0 %v721
    %801 = vmatprep.mubr.bf16.mxu0 %v550
    %802 = vmatmul.mubr.bf16.gmra.mxu0 %v549
    %v803 = vpop.f32.mrf.mxu0
    %v804 = vadd.f32 %v602, %v803
    %v805 = vpop.f32.mrf.mxu0
    %v806 = vadd.f32 %v606, %v805
    %v807 = vpop.f32.mrf.mxu0
    %v808 = vadd.f32 %v602, %v807
    %v809 = vpop.f32.mrf.mxu0
    %v810 = vadd.f32 %v606, %v809
    %811 = vmatprep.mubr.bf16.mxu0 %v552
    %812 = vmatmul.mubr.bf16.gmra.mxu0 %v551
    %v813 = vpop.f32.mrf.mxu0
    %v814 = vadd.f32 %v602, %v813
    %v815 = vpop.f32.mrf.mxu0
    %v816 = vadd.f32 %v606, %v815
    %v817 = vpop.f32.mrf.mxu0
    %v818 = vadd.f32 %v602, %v817
    %v819 = vpop.f32.mrf.mxu0
    %v820 = vadd.f32 %v606, %v819
    %821 = vmatprep.mubr.bf16.mxu0 %v554
    %822 = vmatmul.mubr.bf16.gmra.mxu0 %v553
    %v823 = vpop.f32.mrf.mxu0
    %v824 = vadd.f32 %v602, %v823
    %v825 = vpop.f32.mrf.mxu0
    %v826 = vadd.f32 %v606, %v825
    %v827 = vpop.f32.mrf.mxu0
    %v828 = vadd.f32 %v602, %v827
    %v829 = vpop.f32.mrf.mxu0
    %v830 = vadd.f32 %v606, %v829
    %831 = vmatprep.mubr.bf16.mxu0 %v556
    %832 = vmatmul.mubr.bf16.gmra.mxu0 %v555
    %v833 = vpop.f32.mrf.mxu0
    %v834 = vadd.f32 %v602, %v833
    %v835 = vpop.f32.mrf.mxu0
    %v836 = vadd.f32 %v606, %v835
    %v837 = vpop.f32.mrf.mxu0
    %v838 = vadd.f32 %v602, %v837
    %v839 = vpop.f32.mrf.mxu0
    %v840 = vadd.f32 %v606, %v839
    %841 = vmatprep.mubr.bf16.mxu0 %v558
    %842 = vmatmul.mubr.bf16.gmra.mxu0 %v557
    %v843 = vpop.f32.mrf.mxu0
    %v844 = vadd.f32 %v602, %v843
    %v845 = vpop.f32.mrf.mxu0
    %v846 = vadd.f32 %v606, %v845
    %v847 = vpop.f32.mrf.mxu0
    %v848 = vadd.f32 %v602, %v847
    %v849 = vpop.f32.mrf.mxu0
    %v850 = vadd.f32 %v606, %v849
    %851 = vmatprep.mubr.bf16.mxu0 %v560
    %852 = vmatmul.mubr.bf16.gmra.mxu0 %v559
    %v853 = vpop.f32.mrf.mxu0
    %v854 = vadd.f32 %v602, %v853
    %v855 = vpop.f32.mrf.mxu0
    %v856 = vadd.f32 %v606, %v855
    %v857 = vpop.f32.mrf.mxu0
    %v858 = vadd.f32 %v602, %v857
    %v859 = vpop.f32.mrf.mxu0
    %v860 = vadd.f32 %v606, %v859
    %861 = vmatprep.mubr.bf16.mxu0 %v562
    %862 = vmatmul.mubr.bf16.gmra.mxu0 %v561
    %v863 = vpop.f32.mrf.mxu0
    %v864 = vadd.f32 %v602, %v863
    %v865 = vpop.f32.mrf.mxu0
    %v866 = vadd.f32 %v606, %v865
    %v867 = vpop.f32.mrf.mxu0
    %v868 = vadd.f32 %v602, %v867
    %v869 = vpop.f32.mrf.mxu0
    %v870 = vadd.f32 %v606, %v869
    %871 = vmatprep.mubr.bf16.mxu0 %v564
    %872 = vmatmul.mubr.bf16.gmra.mxu0 %v563
    %v873 = vpop.f32.mrf.mxu0
    %v874 = vadd.f32 %v602, %v873
    %v875 = vpop.f32.mrf.mxu0
    %v876 = vadd.f32 %v606, %v875
    %v877 = vpop.f32.mrf.mxu0
    %v878 = vadd.f32 %v602, %v877
    %v879 = vpop.f32.mrf.mxu0
    %v880 = vadd.f32 %v606, %v879
    %881 = vdwg.mxu0
    %v882 = vmax.f32 %v804, 0.0
    %v883 = vmax.f32 %v806, 0.0
    %v884 = vmax.f32 %v808, 0.0
    %v885 = vmax.f32 %v810, 0.0
    %v886 = vmax.f32 %v814, 0.0
    %v887 = vmax.f32 %v816, 0.0
    %v888 = vmax.f32 %v818, 0.0
    %v889 = vmax.f32 %v820, 0.0
    %v890 = vmax.f32 %v824, 0.0
    %v891 = vmax.f32 %v826, 0.0
    %v892 = vmax.f32 %v828, 0.0
    %v893 = vmax.f32 %v830, 0.0
    %v894 = vmax.f32 %v834, 0.0
    %v895 = vmax.f32 %v836, 0.0
    %v896 = vmax.f32 %v838, 0.0
    %v897 = vmax.f32 %v840, 0.0
    %v898 = vmax.f32 %v844, 0.0
    %v899 = vmax.f32 %v846, 0.0
    %v900 = vmax.f32 %v848, 0.0
    %v901 = vmax.f32 %v850, 0.0
    %v902 = vmax.f32 %v854, 0.0
    %v903 = vmax.f32 %v856, 0.0
    %v904 = vmax.f32 %v858, 0.0
    %v905 = vmax.f32 %v860, 0.0
    %v906 = vmax.f32 %v864, 0.0
    %v907 = vmax.f32 %v866, 0.0
    %v908 = vmax.f32 %v868, 0.0
    %v909 = vmax.f32 %v870, 0.0
    %v910 = vmax.f32 %v874, 0.0
    %v911 = vmax.f32 %v876, 0.0
    %v912 = vmax.f32 %v878, 0.0
    %v913 = vmax.f32 %v880, 0.0
    %v914 = vpack.c.bf16 %v884, %v882
    %v915 = vpack.c.bf16 %v885, %v883
    %v916 = vpack.c.bf16 %v888, %v886
    %v917 = vpack.c.bf16 %v889, %v887
    %v918 = vpack.c.bf16 %v892, %v890
    %v919 = vpack.c.bf16 %v893, %v891
    %v920 = vpack.c.bf16 %v896, %v894
    %v921 = vpack.c.bf16 %v897, %v895
    %v922 = vpack.c.bf16 %v900, %v898
    %v923 = vpack.c.bf16 %v901, %v899
    %v924 = vpack.c.bf16 %v904, %v902
    %v925 = vpack.c.bf16 %v905, %v903
    %v926 = vpack.c.bf16 %v908, %v906
    %v927 = vpack.c.bf16 %v909, %v907
    %v928 = vpack.c.bf16 %v912, %v910
    %v929 = vpack.c.bf16 %v913, %v911
    %v930 = vld [vmem:[%s5] sm:$0xf]
    %v931 = vld [vmem:[%s5 + $0x4] sm:$0xf]
    %v932 = vld [vmem:[%s5 + $0x8] sm:$0xf]
    %v933 = vld [vmem:[%s5 + $0xc] sm:$0xf]
    %v934 = vld [vmem:[%s5 + $0x10] sm:$0xf]
    %v935 = vld [vmem:[%s5 + $0x14] sm:$0xf]
    %v936 = vld [vmem:[%s5 + $0x18] sm:$0xf]
    %v937 = vld [vmem:[%s5 + $0x1c] sm:$0xf]
    %v938 = vld [vmem:[%s5 + $0x20] sm:$0xf]
    %v939 = vld [vmem:[%s5 + $0x24] sm:$0xf]
    %v940 = vld [vmem:[%s5 + $0x28] sm:$0xf]
    %v941 = vld [vmem:[%s5 + $0x2c] sm:$0xf]
    %v942 = vld [vmem:[%s5 + $0x30] sm:$0xf]
    %v943 = vld [vmem:[%s5 + $0x34] sm:$0xf]
    %v944 = vld [vmem:[%s5 + $0x38] sm:$0xf]
    %v945 = vld [vmem:[%s5 + $0x3c] sm:$0xf]
    %v946 = vld [vmem:[%s5 + $0x40] sm:$0xf]
    %v947 = vld [vmem:[%s5 + $0x44] sm:$0xf]
    %v948 = vld [vmem:[%s5 + $0x48] sm:$0xf]
    %v949 = vld [vmem:[%s5 + $0x4c] sm:$0xf]
    %v950 = vld [vmem:[%s5 + $0x50] sm:$0xf]
    %v951 = vld [vmem:[%s5 + $0x54] sm:$0xf]
    %v952 = vld [vmem:[%s5 + $0x58] sm:$0xf]
    %v953 = vld [vmem:[%s5 + $0x5c] sm:$0xf]
    %v954 = vld [vmem:[%s5 + $0x60] sm:$0xf]
    %v955 = vld [vmem:[%s5 + $0x64] sm:$0xf]
    %v956 = vld [vmem:[%s5 + $0x68] sm:$0xf]
    %v957 = vld [vmem:[%s5 + $0x6c] sm:$0xf]
    %v958 = vld [vmem:[%s5 + $0x70] sm:$0xf]
    %v959 = vld [vmem:[%s5 + $0x74] sm:$0xf]
    %v960 = vld [vmem:[%s5 + $0x78] sm:$0xf]
    %v961 = vld [vmem:[%s5 + $0x7c] sm:$0xf]
    %v962 = vld [vmem:[%s6] sm:$0x1]
    %v964 = vlaneseq
    %v965 = vshrl.u32 %v964, 7
    %v966 = vsub.s32 0, %v965
    %v967 = vrot.slane %v962, %v966
    %v1001 = vunpack.c.l.b16 %v930
    %v1002 = vunpack.c.l.b16 %v931
    %v1003 = vunpack.c.l.b16 %v932
    %v1004 = vunpack.c.l.b16 %v933
    %v1005 = vunpack.c.l.b16 %v934
    %v1006 = vunpack.c.l.b16 %v935
    %v1007 = vunpack.c.l.b16 %v936
    %v1008 = vunpack.c.l.b16 %v937
    %v1009 = vunpack.c.l.b16 %v938
    %v1010 = vunpack.c.l.b16 %v939
    %v1011 = vunpack.c.l.b16 %v940
    %v1012 = vunpack.c.l.b16 %v941
    %v1013 = vunpack.c.l.b16 %v942
    %v1014 = vunpack.c.l.b16 %v943
    %v1015 = vunpack.c.l.b16 %v944
    %v1016 = vunpack.c.l.b16 %v945
    %v1017 = vunpack.c.l.b16 %v946
    %v1018 = vunpack.c.l.b16 %v947
    %v1019 = vunpack.c.l.b16 %v948
    %v1020 = vunpack.c.l.b16 %v949
    %v1021 = vunpack.c.l.b16 %v950
    %v1022 = vunpack.c.l.b16 %v951
    %v1023 = vunpack.c.l.b16 %v952
    %v1024 = vunpack.c.l.b16 %v953
    %v1025 = vunpack.c.l.b16 %v954
    %v1026 = vunpack.c.l.b16 %v955
    %v1027 = vunpack.c.l.b16 %v956
    %v1028 = vunpack.c.l.b16 %v957
    %v1029 = vunpack.c.l.b16 %v958
    %v1030 = vunpack.c.l.b16 %v959
    %v1031 = vunpack.c.l.b16 %v960
    %v1032 = vunpack.c.l.b16 %v961
    %v1033 = vpack.c.b16 %v1002, %v1001
    %v1034 = vpack.c.b16 %v1004, %v1003
    %v1035 = vpack.c.b16 %v1006, %v1005
    %v1036 = vpack.c.b16 %v1008, %v1007
    %v1037 = vpack.c.b16 %v1010, %v1009
    %v1038 = vpack.c.b16 %v1012, %v1011
    %v1039 = vpack.c.b16 %v1014, %v1013
    %v1040 = vpack.c.b16 %v1016, %v1015
    %v1041 = vpack.c.b16 %v1018, %v1017
    %v1042 = vpack.c.b16 %v1020, %v1019
    %v1043 = vpack.c.b16 %v1022, %v1021
    %v1044 = vpack.c.b16 %v1024, %v1023
    %v1045 = vpack.c.b16 %v1026, %v1025
    %v1046 = vpack.c.b16 %v1028, %v1027
    %v1047 = vpack.c.b16 %v1030, %v1029
    %v1048 = vpack.c.b16 %v1032, %v1031
    %1065 = vmatprep.subr.bf16.mxu0 0
    %1066 = vmatpush1.bf16.msra.mxu0 %v1040
    %1067 = vmatprep.subr.bf16.mxu0 0
    %1068 = vmatpush1.bf16.msra.mxu0 %v1039
    %1069 = vmatprep.subr.bf16.mxu0 0
    %1070 = vmatpush1.bf16.msra.mxu0 %v1038
    %1071 = vmatprep.subr.bf16.mxu0 0
    %1072 = vmatpush1.bf16.msra.mxu0 %v1037
    %1073 = vmatprep.subr.bf16.mxu0 0
    %1074 = vmatpush1.bf16.msra.mxu0 %v1036
    %1075 = vmatprep.subr.bf16.mxu0 0
    %1076 = vmatpush1.bf16.msra.mxu0 %v1035
    %1077 = vmatprep.subr.bf16.mxu0 0
    %1078 = vmatpush1.bf16.msra.mxu0 %v1034
    %1079 = vmatprep.subr.bf16.mxu0 0
    %1080 = vmatpush1.bf16.msra.mxu0 %v1033
    %1081 = vmatprep.subr.bf16.mxu0 0
    %1082 = vmatpush2.bf16.msra.mxu0 %v1048
    %1083 = vmatprep.subr.bf16.mxu0 0
    %1084 = vmatpush2.bf16.msra.mxu0 %v1047
    %1085 = vmatprep.subr.bf16.mxu0 0
    %1086 = vmatpush2.bf16.msra.mxu0 %v1046
    %1087 = vmatprep.subr.bf16.mxu0 0
    %1088 = vmatpush2.bf16.msra.mxu0 %v1045
    %1089 = vmatprep.subr.bf16.mxu0 0
    %1090 = vmatpush2.bf16.msra.mxu0 %v1044
    %1091 = vmatprep.subr.bf16.mxu0 0
    %1092 = vmatpush2.bf16.msra.mxu0 %v1043
    %1093 = vmatprep.subr.bf16.mxu0 0
    %1094 = vmatpush2.bf16.msra.mxu0 %v1042
    %1095 = vmatprep.subr.bf16.mxu0 0
    %1096 = vmatpush2.bf16.msra.mxu0 %v1041
    %1097 = vmatprep.mubr.bf16.mxu0 %v915
    %1098 = vmatmul.mubr.bf16.gmra.mxu0 %v914
    %v1099 = vpop.f32.mrf.mxu0
    %v1100 = vadd.f32 %v967, %v1099
    %v1101 = vpop.f32.mrf.mxu0
    %v1102 = vpop.f32.mrf.mxu0
    %v1103 = vadd.f32 %v967, %v1102
    %v1104 = vpop.f32.mrf.mxu0
    %1105 = vmatprep.mubr.bf16.mxu0 %v917
    %1106 = vmatmul.mubr.bf16.gmra.mxu0 %v916
    %v1107 = vpop.f32.mrf.mxu0
    %v1108 = vadd.f32 %v967, %v1107
    %v1109 = vpop.f32.mrf.mxu0
    %v1110 = vpop.f32.mrf.mxu0
    %v1111 = vadd.f32 %v967, %v1110
    %v1112 = vpop.f32.mrf.mxu0
    %1113 = vmatprep.mubr.bf16.mxu0 %v919
    %1114 = vmatmul.mubr.bf16.gmra.mxu0 %v918
    %v1115 = vpop.f32.mrf.mxu0
    %v1116 = vadd.f32 %v967, %v1115
    %v1117 = vpop.f32.mrf.mxu0
    %v1118 = vpop.f32.mrf.mxu0
    %v1119 = vadd.f32 %v967, %v1118
    %v1120 = vpop.f32.mrf.mxu0
    %1121 = vmatprep.mubr.bf16.mxu0 %v921
    %1122 = vmatmul.mubr.bf16.gmra.mxu0 %v920
    %v1123 = vpop.f32.mrf.mxu0
    %v1124 = vadd.f32 %v967, %v1123
    %v1125 = vpop.f32.mrf.mxu0
    %v1126 = vpop.f32.mrf.mxu0
    %v1127 = vadd.f32 %v967, %v1126
    %v1128 = vpop.f32.mrf.mxu0
    %1129 = vmatprep.mubr.bf16.mxu0 %v923
    %1130 = vmatmul.mubr.bf16.gmra.mxu0 %v922
    %v1131 = vpop.f32.mrf.mxu0
    %v1132 = vadd.f32 %v967, %v1131
    %v1133 = vpop.f32.mrf.mxu0
    %v1134 = vpop.f32.mrf.mxu0
    %v1135 = vadd.f32 %v967, %v1134
    %v1136 = vpop.f32.mrf.mxu0
    %1137 = vmatprep.mubr.bf16.mxu0 %v925
    %1138 = vmatmul.mubr.bf16.gmra.mxu0 %v924
    %v1139 = vpop.f32.mrf.mxu0
    %v1140 = vadd.f32 %v967, %v1139
    %v1141 = vpop.f32.mrf.mxu0
    %v1142 = vpop.f32.mrf.mxu0
    %v1143 = vadd.f32 %v967, %v1142
    %v1144 = vpop.f32.mrf.mxu0
    %1145 = vmatprep.mubr.bf16.mxu0 %v927
    %1146 = vmatmul.mubr.bf16.gmra.mxu0 %v926
    %v1147 = vpop.f32.mrf.mxu0
    %v1148 = vadd.f32 %v967, %v1147
    %v1149 = vpop.f32.mrf.mxu0
    %v1150 = vpop.f32.mrf.mxu0
    %v1151 = vadd.f32 %v967, %v1150
    %v1152 = vpop.f32.mrf.mxu0
    %1153 = vmatprep.mubr.bf16.mxu0 %v929
    %1154 = vmatmul.mubr.bf16.gmra.mxu0 %v928
    %v1155 = vpop.f32.mrf.mxu0
    %v1156 = vadd.f32 %v967, %v1155
    %v1157 = vpop.f32.mrf.mxu0
    %v1158 = vpop.f32.mrf.mxu0
    %v1159 = vadd.f32 %v967, %v1158
    %v1160 = vpop.f32.mrf.mxu0
    %1161 = vdwg.mxu0
    %1162 = vmax.xlane.f32.xlu0 %v1100
    %v1163 = vpop.xlane.xlu0 %1162
    %1164 = vmax.xlane.f32.xlu0 %v1103
    %v1165 = vpop.xlane.xlu0 %1164
    %1166 = vmax.xlane.f32.xlu0 %v1108
    %v1167 = vpop.xlane.xlu0 %1166
    %1168 = vmax.xlane.f32.xlu0 %v1111
    %v1169 = vpop.xlane.xlu0 %1168
    %1170 = vmax.xlane.f32.xlu0 %v1116
    %v1171 = vpop.xlane.xlu0 %1170
    %1172 = vmax.xlane.f32.xlu0 %v1119
    %v1173 = vpop.xlane.xlu0 %1172
    %1174 = vmax.xlane.f32.xlu0 %v1124
    %v1175 = vpop.xlane.xlu0 %1174
    %1176 = vmax.xlane.f32.xlu0 %v1127
    %v1177 = vpop.xlane.xlu0 %1176
    %1178 = vmax.xlane.f32.xlu0 %v1132
    %v1179 = vpop.xlane.xlu0 %1178
    %1180 = vmax.xlane.f32.xlu0 %v1135
    %v1181 = vpop.xlane.xlu0 %1180
    %1182 = vmax.xlane.f32.xlu0 %v1140
    %v1183 = vpop.xlane.xlu0 %1182
    %1184 = vmax.xlane.f32.xlu0 %v1143
    %v1185 = vpop.xlane.xlu0 %1184
    %1186 = vmax.xlane.f32.xlu0 %v1148
    %v1187 = vpop.xlane.xlu0 %1186
    %1188 = vmax.xlane.f32.xlu0 %v1151
    %v1189 = vpop.xlane.xlu0 %1188
    %1190 = vmax.xlane.f32.xlu0 %v1156
    %v1191 = vpop.xlane.xlu0 %1190
    %1192 = vmax.xlane.f32.xlu0 %v1159
    %v1193 = vpop.xlane.xlu0 %1192
    %v1194 = vsub.f32 %v1100, %v1163
    %v1195 = vsub.f32 %v1103, %v1165
    %v1196 = vsub.f32 %v1108, %v1167
    %v1197 = vsub.f32 %v1111, %v1169
    %v1198 = vsub.f32 %v1116, %v1171
    %v1199 = vsub.f32 %v1119, %v1173
    %v1200 = vsub.f32 %v1124, %v1175
    %v1201 = vsub.f32 %v1127, %v1177
    %v1202 = vsub.f32 %v1132, %v1179
    %v1203 = vsub.f32 %v1135, %v1181
    %v1204 = vsub.f32 %v1140, %v1183
    %v1205 = vsub.f32 %v1143, %v1185
    %v1206 = vsub.f32 %v1148, %v1187
    %v1207 = vsub.f32 %v1151, %v1189
    %v1208 = vsub.f32 %v1156, %v1191
    %v1209 = vsub.f32 %v1159, %v1193
    %v1210 = vmul.f32 %v1194, 1.442695
    %v1211 = vpow.pop %v1210
    %v1212 = vmul.f32 %v1195, 1.442695
    %v1213 = vpow.pop %v1212
    %v1214 = vmul.f32 %v1196, 1.442695
    %v1215 = vpow.pop %v1214
    %v1216 = vmul.f32 %v1197, 1.442695
    %v1217 = vpow.pop %v1216
    %v1218 = vmul.f32 %v1198, 1.442695
    %v1219 = vpow.pop %v1218
    %v1220 = vmul.f32 %v1199, 1.442695
    %v1221 = vpow.pop %v1220
    %v1222 = vmul.f32 %v1200, 1.442695
    %v1223 = vpow.pop %v1222
    %v1224 = vmul.f32 %v1201, 1.442695
    %v1225 = vpow.pop %v1224
    %v1226 = vmul.f32 %v1202, 1.442695
    %v1227 = vpow.pop %v1226
    %v1228 = vmul.f32 %v1203, 1.442695
    %v1229 = vpow.pop %v1228
    %v1230 = vmul.f32 %v1204, 1.442695
    %v1231 = vpow.pop %v1230
    %v1232 = vmul.f32 %v1205, 1.442695
    %v1233 = vpow.pop %v1232
    %v1234 = vmul.f32 %v1206, 1.442695
    %v1235 = vpow.pop %v1234
    %v1236 = vmul.f32 %v1207, 1.442695
    %v1237 = vpow.pop %v1236
    %v1238 = vmul.f32 %v1208, 1.442695
    %v1239 = vpow.pop %v1238
    %v1240 = vmul.f32 %v1209, 1.442695
    %v1241 = vpow.pop %v1240
    %1242 = vadd.xlane.f32.xlu0 %v1211
    %v1243 = vpop.xlane.xlu0 %1242
    %1244 = vadd.xlane.f32.xlu0 %v1213
    %v1245 = vpop.xlane.xlu0 %1244
    %1246 = vadd.xlane.f32.xlu0 %v1215
    %v1247 = vpop.xlane.xlu0 %1246
    %1248 = vadd.xlane.f32.xlu0 %v1217
    %v1249 = vpop.xlane.xlu0 %1248
    %1250 = vadd.xlane.f32.xlu0 %v1219
    %v1251 = vpop.xlane.xlu0 %1250
    %1252 = vadd.xlane.f32.xlu0 %v1221
    %v1253 = vpop.xlane.xlu0 %1252
    %1254 = vadd.xlane.f32.xlu0 %v1223
    %v1255 = vpop.xlane.xlu0 %1254
    %1256 = vadd.xlane.f32.xlu0 %v1225
    %v1257 = vpop.xlane.xlu0 %1256
    %1258 = vadd.xlane.f32.xlu0 %v1227
    %v1259 = vpop.xlane.xlu0 %1258
    %1260 = vadd.xlane.f32.xlu0 %v1229
    %v1261 = vpop.xlane.xlu0 %1260
    %1262 = vadd.xlane.f32.xlu0 %v1231
    %v1263 = vpop.xlane.xlu0 %1262
    %1264 = vadd.xlane.f32.xlu0 %v1233
    %v1265 = vpop.xlane.xlu0 %1264
    %1266 = vadd.xlane.f32.xlu0 %v1235
    %v1267 = vpop.xlane.xlu0 %1266
    %1268 = vadd.xlane.f32.xlu0 %v1237
    %v1269 = vpop.xlane.xlu0 %1268
    %1270 = vadd.xlane.f32.xlu0 %v1239
    %v1271 = vpop.xlane.xlu0 %1270
    %1272 = vadd.xlane.f32.xlu0 %v1241
    %v1273 = vpop.xlane.xlu0 %1272
    %v1274 = vlog2.pop %v1243
    %v1275 = vmul.f32 %v1274, 0.6931472
    %v1276 = vlog2.pop %v1245
    %v1277 = vmul.f32 %v1276, 0.6931472
    %v1278 = vlog2.pop %v1247
    %v1279 = vmul.f32 %v1278, 0.6931472
    %v1280 = vlog2.pop %v1249
    %v1281 = vmul.f32 %v1280, 0.6931472
    %v1282 = vlog2.pop %v1251
    %v1283 = vmul.f32 %v1282, 0.6931472
    %v1284 = vlog2.pop %v1253
    %v1285 = vmul.f32 %v1284, 0.6931472
    %v1286 = vlog2.pop %v1255
    %v1287 = vmul.f32 %v1286, 0.6931472
    %v1288 = vlog2.pop %v1257
    %v1289 = vmul.f32 %v1288, 0.6931472
    %v1290 = vlog2.pop %v1259
    %v1291 = vmul.f32 %v1290, 0.6931472
    %v1292 = vlog2.pop %v1261
    %v1293 = vmul.f32 %v1292, 0.6931472
    %v1294 = vlog2.pop %v1263
    %v1295 = vmul.f32 %v1294, 0.6931472
    %v1296 = vlog2.pop %v1265
    %v1297 = vmul.f32 %v1296, 0.6931472
    %v1298 = vlog2.pop %v1267
    %v1299 = vmul.f32 %v1298, 0.6931472
    %v1300 = vlog2.pop %v1269
    %v1301 = vmul.f32 %v1300, 0.6931472
    %v1302 = vlog2.pop %v1271
    %v1303 = vmul.f32 %v1302, 0.6931472
    %v1304 = vlog2.pop %v1273
    %v1305 = vmul.f32 %v1304, 0.6931472
    %v1306 = vsub.f32 %v1194, %v1275
    %v1307 = vsub.f32 %v1195, %v1277
    %v1308 = vsub.f32 %v1196, %v1279
    %v1309 = vsub.f32 %v1197, %v1281
    %v1310 = vsub.f32 %v1198, %v1283
    %v1311 = vsub.f32 %v1199, %v1285
    %v1312 = vsub.f32 %v1200, %v1287
    %v1313 = vsub.f32 %v1201, %v1289
    %v1314 = vsub.f32 %v1202, %v1291
    %v1315 = vsub.f32 %v1203, %v1293
    %v1316 = vsub.f32 %v1204, %v1295
    %v1317 = vsub.f32 %v1205, %v1297
    %v1318 = vsub.f32 %v1206, %v1299
    %v1319 = vsub.f32 %v1207, %v1301
    %v1320 = vsub.f32 %v1208, %v1303
    %v1321 = vsub.f32 %v1209, %v1305
    %1322 = vst [vmem:[%s7] sm:$0xff] %v1306
    %1323 = vst [vmem:[%s7 + $0x8] sm:$0xff] %v1307
    %1324 = vst [vmem:[%s7 + $0x10] sm:$0xff] %v1308
    %1325 = vst [vmem:[%s7 + $0x18] sm:$0xff] %v1309
    %1326 = vst [vmem:[%s7 + $0x20] sm:$0xff] %v1310
    %1327 = vst [vmem:[%s7 + $0x28] sm:$0xff] %v1311
    %1328 = vst [vmem:[%s7 + $0x30] sm:$0xff] %v1312
    %1329 = vst [vmem:[%s7 + $0x38] sm:$0xff] %v1313
    %1330 = vst [vmem:[%s7 + $0x40] sm:$0xff] %v1314
    %1331 = vst [vmem:[%s7 + $0x48] sm:$0xff] %v1315
    %1332 = vst [vmem:[%s7 + $0x50] sm:$0xff] %v1316
    %1333 = vst [vmem:[%s7 + $0x58] sm:$0xff] %v1317
    %1334 = vst [vmem:[%s7 + $0x60] sm:$0xff] %v1318
    %1335 = vst [vmem:[%s7 + $0x68] sm:$0xff] %v1319
    %1336 = vst [vmem:[%s7 + $0x70] sm:$0xff] %v1320
    %1337 = vst [vmem:[%s7 + $0x78] sm:$0xff] %v1321
  $region37: #{aaf_gcnconv_forward.5} parent=0 // pred_fallthru
    _
  // Predicated region
  $region38: #{aaf_gcnconv_forward.5} parent=0 // pred_check
    _
  $region39: #{aaf_gcnconv_forward.5} parent=0 // pred_check_branch
    %1339 = sbr.rel (0) target = $region41
  $region40: #{aaf_gcnconv_forward.5} parent=0 // pred_region
    _
  $region41: #{aaf_gcnconv_forward.5} parent=0 // pred_fallthru
    _
  // Predicated region
  $region42: #{aaf_gcnconv_forward.5} parent=0 // pred_check
    _
  $region43: #{aaf_gcnconv_forward.5} parent=0 // pred_check_branch
    %1341 = sbr.rel (0) target = $region45
  $region44: #{aaf_gcnconv_forward.5} parent=0 // pred_region
    _
  $region45: #{aaf_gcnconv_forward.5} parent=0 // pred_fallthru
    _

// kernel: aaf_gcnconv_forward.3
$region0: #{aaf_gcnconv_forward.3}
  #allocation0 [shape = 'u32[]', space=smem, size = 0x4, offset = 0x4, fixed_abs, tag = 'smem constant byte address 0x4 - core index']
  #allocation1 [shape = 'u32[144,128]{1,0:T(1,128)}', space=vmem, size = 0x12000, scoped, tag = 'internal scratch']
  #allocation2 [shape = 'f32[128,256]{1,0:T(8,128)}', space=vmem, size = 0x20000, scoped, tag = 'scratch operand']
  %s0 = inlined_call_operand.vmem [shape: bf16[128,128], index: 0, kind: input, shape index: {}]
  %s1 = inlined_call_operand.vmem [shape: bf16[128,256], index: 1, kind: input, shape index: {}]
  %s2 = inlined_call_operand.vmem [shape: f32[1,256], index: 2, kind: input, shape index: {}]
  %s3 = inlined_call_operand.vmem [shape: bf16[256,256], index: 3, kind: input, shape index: {}]
  %s4 = inlined_call_operand.vmem [shape: bf16[128,256], index: 4, kind: output, shape index: {}]
  %s5 = sld [smem:[#allocation0]]
  $region34: #{aaf_gcnconv_forward.3} parent=0
    _
  %s7 = ssub.s32 1, %s5
  %s8 = scalar_select 0, %s7, %s5
  // Predicated region
  $region2: #{aaf_gcnconv_forward.3} parent=0 // pred_check
    _
  $region3: #{aaf_gcnconv_forward.3} parent=0 // pred_check_branch
    %10 = sbr.rel (0) target = $region5
  $region4: #{aaf_gcnconv_forward.3} parent=0 // pred_region
    _
  $region5: #{aaf_gcnconv_forward.3} parent=0 // pred_fallthru
    _
  // Predicated region
  $region6: #{aaf_gcnconv_forward.3} parent=0 // pred_check
    _
  $region7: #{aaf_gcnconv_forward.3} parent=0 // pred_check_branch
    %12 = sbr.rel (0) target = $region9
  $region8: #{aaf_gcnconv_forward.3} parent=0 // pred_region
    _
  $region9: #{aaf_gcnconv_forward.3} parent=0 // pred_fallthru
    _
  // Predicated region
  $region10: #{aaf_gcnconv_forward.3} parent=0 // pred_check
    _
  $region11: #{aaf_gcnconv_forward.3} parent=0 // pred_check_branch
    %14 = sbr.rel (0) target = $region13
  $region12: #{aaf_gcnconv_forward.3} parent=0 // pred_region
    _
  $region13: #{aaf_gcnconv_forward.3} parent=0 // pred_fallthru
    _
  // Predicated region
  $region14: #{aaf_gcnconv_forward.3} parent=0 // pred_check
    _
  $region15: #{aaf_gcnconv_forward.3} parent=0 // pred_check_branch
    %16 = sbr.rel (0) target = $region17
  $region16: #{aaf_gcnconv_forward.3} parent=0 // pred_region
    _
  $region17: #{aaf_gcnconv_forward.3} parent=0 // pred_fallthru
    _
  %p18 = scmp.eq.s32.totalorder 0, 0
  // Predicated region
  $region18: #{aaf_gcnconv_forward.3} parent=0 // pred_check
    %p19 = pneg %p18
  $region19: #{aaf_gcnconv_forward.3} parent=0 // pred_check_branch
    %21 = sbr.rel (%p19) target = $region21
  $region20: #{aaf_gcnconv_forward.3} parent=0 // pred_region
    %22 = vst [vmem:[#allocation2] sm:$0xff] 0.0
    %23 = vst [vmem:[#allocation2 + $0x8] sm:$0xff] 0.0
    %24 = vst [vmem:[#allocation2 + $0x10] sm:$0xff] 0.0
    %25 = vst [vmem:[#allocation2 + $0x18] sm:$0xff] 0.0
    %26 = vst [vmem:[#allocation2 + $0x20] sm:$0xff] 0.0
    %27 = vst [vmem:[#allocation2 + $0x28] sm:$0xff] 0.0
    %28 = vst [vmem:[#allocation2 + $0x30] sm:$0xff] 0.0
    %29 = vst [vmem:[#allocation2 + $0x38] sm:$0xff] 0.0
    %30 = vst [vmem:[#allocation2 + $0x40] sm:$0xff] 0.0
    %31 = vst [vmem:[#allocation2 + $0x48] sm:$0xff] 0.0
    %32 = vst [vmem:[#allocation2 + $0x50] sm:$0xff] 0.0
    %33 = vst [vmem:[#allocation2 + $0x58] sm:$0xff] 0.0
    %34 = vst [vmem:[#allocation2 + $0x60] sm:$0xff] 0.0
    %35 = vst [vmem:[#allocation2 + $0x68] sm:$0xff] 0.0
    %36 = vst [vmem:[#allocation2 + $0x70] sm:$0xff] 0.0
    %37 = vst [vmem:[#allocation2 + $0x78] sm:$0xff] 0.0
    %38 = vst [vmem:[#allocation2 + $0x80] sm:$0xff] 0.0
    %39 = vst [vmem:[#allocation2 + $0x88] sm:$0xff] 0.0
    %40 = vst [vmem:[#allocation2 + $0x90] sm:$0xff] 0.0
    %41 = vst [vmem:[#allocation2 + $0x98] sm:$0xff] 0.0
    %42 = vst [vmem:[#allocation2 + $0xa0] sm:$0xff] 0.0
    %43 = vst [vmem:[#allocation2 + $0xa8] sm:$0xff] 0.0
    %44 = vst [vmem:[#allocation2 + $0xb0] sm:$0xff] 0.0
    %45 = vst [vmem:[#allocation2 + $0xb8] sm:$0xff] 0.0
    %46 = vst [vmem:[#allocation2 + $0xc0] sm:$0xff] 0.0
    %47 = vst [vmem:[#allocation2 + $0xc8] sm:$0xff] 0.0
    %48 = vst [vmem:[#allocation2 + $0xd0] sm:$0xff] 0.0
    %49 = vst [vmem:[#allocation2 + $0xd8] sm:$0xff] 0.0
    %50 = vst [vmem:[#allocation2 + $0xe0] sm:$0xff] 0.0
    %51 = vst [vmem:[#allocation2 + $0xe8] sm:$0xff] 0.0
    %52 = vst [vmem:[#allocation2 + $0xf0] sm:$0xff] 0.0
    %53 = vst [vmem:[#allocation2 + $0xf8] sm:$0xff] 0.0
  $region21: #{aaf_gcnconv_forward.3} parent=0 // pred_fallthru
    _
  %s54 = smul.u32 0, 128
  %s55 = sshra.s32 %s54, 3
  %s56 = sand.u32 %s54, 7
  %s57 = smul.u32 %s55, 2
  %s58 = smul.addr %s57, 4
  %s59 = scalar_lea.vmem %s1, %s58
  %v60 = vld [vmem:[%s59] sm:$0xff]
  %v61 = vld [vmem:[%s59 + $0x8] sm:$0xff]
  %v62 = vld [vmem:[%s59 + $0x10] sm:$0xff]
  %v63 = vld [vmem:[%s59 + $0x18] sm:$0xff]
  %v64 = vld [vmem:[%s59 + $0x20] sm:$0xff]
  %v65 = vld [vmem:[%s59 + $0x28] sm:$0xff]
  %v66 = vld [vmem:[%s59 + $0x30] sm:$0xff]
  %v67 = vld [vmem:[%s59 + $0x38] sm:$0xff]
  %v68 = vld [vmem:[%s59 + $0x40] sm:$0xff]
  %v69 = vld [vmem:[%s59 + $0x48] sm:$0xff]
  %v70 = vld [vmem:[%s59 + $0x50] sm:$0xff]
  %v71 = vld [vmem:[%s59 + $0x58] sm:$0xff]
  %v72 = vld [vmem:[%s59 + $0x60] sm:$0xff]
  %v73 = vld [vmem:[%s59 + $0x68] sm:$0xff]
  %v74 = vld [vmem:[%s59 + $0x70] sm:$0xff]
  %v75 = vld [vmem:[%s59 + $0x78] sm:$0xff]
  %v76 = vld [vmem:[#allocation2] sm:$0xff]
  %v77 = vld [vmem:[#allocation2 + $0x8] sm:$0xff]
  %v78 = vld [vmem:[#allocation2 + $0x10] sm:$0xff]
  %v79 = vld [vmem:[#allocation2 + $0x18] sm:$0xff]
  %v80 = vld [vmem:[#allocation2 + $0x20] sm:$0xff]
  %v81 = vld [vmem:[#allocation2 + $0x28] sm:$0xff]
  %v82 = vld [vmem:[#allocation2 + $0x30] sm:$0xff]
  %v83 = vld [vmem:[#allocation2 + $0x38] sm:$0xff]
  %v84 = vld [vmem:[#allocation2 + $0x40] sm:$0xff]
  %v85 = vld [vmem:[#allocation2 + $0x48] sm:$0xff]
  %v86 = vld [vmem:[#allocation2 + $0x50] sm:$0xff]
  %v87 = vld [vmem:[#allocation2 + $0x58] sm:$0xff]
  %v88 = vld [vmem:[#allocation2 + $0x60] sm:$0xff]
  %v89 = vld [vmem:[#allocation2 + $0x68] sm:$0xff]
  %v90 = vld [vmem:[#allocation2 + $0x70] sm:$0xff]
  %v91 = vld [vmem:[#allocation2 + $0x78] sm:$0xff]
  %v92 = vld [vmem:[#allocation2 + $0x80] sm:$0xff]
  %v93 = vld [vmem:[#allocation2 + $0x88] sm:$0xff]
  %v94 = vld [vmem:[#allocation2 + $0x90] sm:$0xff]
  %v95 = vld [vmem:[#allocation2 + $0x98] sm:$0xff]
  %v96 = vld [vmem:[#allocation2 + $0xa0] sm:$0xff]
  %v97 = vld [vmem:[#allocation2 + $0xa8] sm:$0xff]
  %v98 = vld [vmem:[#allocation2 + $0xb0] sm:$0xff]
  %v99 = vld [vmem:[#allocation2 + $0xb8] sm:$0xff]
  %v100 = vld [vmem:[#allocation2 + $0xc0] sm:$0xff]
  %v101 = vld [vmem:[#allocation2 + $0xc8] sm:$0xff]
  %v102 = vld [vmem:[#allocation2 + $0xd0] sm:$0xff]
  %v103 = vld [vmem:[#allocation2 + $0xd8] sm:$0xff]
  %v104 = vld [vmem:[#allocation2 + $0xe0] sm:$0xff]
  %v105 = vld [vmem:[#allocation2 + $0xe8] sm:$0xff]
  %v106 = vld [vmem:[#allocation2 + $0xf0] sm:$0xff]
  %v107 = vld [vmem:[#allocation2 + $0xf8] sm:$0xff]
  %v108 = vld [vmem:[%s0] sm:$0xf]
  %v109 = vld [vmem:[%s0 + $0x4] sm:$0xf]
  %v110 = vld [vmem:[%s0 + $0x8] sm:$0xf]
  %v111 = vld [vmem:[%s0 + $0xc] sm:$0xf]
  %v112 = vld [vmem:[%s0 + $0x10] sm:$0xf]
  %v113 = vld [vmem:[%s0 + $0x14] sm:$0xf]
  %v114 = vld [vmem:[%s0 + $0x18] sm:$0xf]
  %v115 = vld [vmem:[%s0 + $0x1c] sm:$0xf]
  %v116 = vld [vmem:[%s0 + $0x20] sm:$0xf]
  %v117 = vld [vmem:[%s0 + $0x24] sm:$0xf]
  %v118 = vld [vmem:[%s0 + $0x28] sm:$0xf]
  %v119 = vld [vmem:[%s0 + $0x2c] sm:$0xf]
  %v120 = vld [vmem:[%s0 + $0x30] sm:$0xf]
  %v121 = vld [vmem:[%s0 + $0x34] sm:$0xf]
  %v122 = vld [vmem:[%s0 + $0x38] sm:$0xf]
  %v123 = vld [vmem:[%s0 + $0x3c] sm:$0xf]
  %v140 = vunpack.c.l.b16 %v108
  %v141 = vunpack.c.l.b16 %v109
  %v142 = vunpack.c.l.b16 %v110
  %v143 = vunpack.c.l.b16 %v111
  %v144 = vunpack.c.l.b16 %v112
  %v145 = vunpack.c.l.b16 %v113
  %v146 = vunpack.c.l.b16 %v114
  %v147 = vunpack.c.l.b16 %v115
  %v148 = vunpack.c.l.b16 %v116
  %v149 = vunpack.c.l.b16 %v117
  %v150 = vunpack.c.l.b16 %v118
  %v151 = vunpack.c.l.b16 %v119
  %v152 = vunpack.c.l.b16 %v120
  %v153 = vunpack.c.l.b16 %v121
  %v154 = vunpack.c.l.b16 %v122
  %v155 = vunpack.c.l.b16 %v123
  %v156 = vpack.c.b16 %v141, %v140
  %v157 = vpack.c.b16 %v143, %v142
  %v158 = vpack.c.b16 %v145, %v144
  %v159 = vpack.c.b16 %v147, %v146
  %v160 = vpack.c.b16 %v149, %v148
  %v161 = vpack.c.b16 %v151, %v150
  %v162 = vpack.c.b16 %v153, %v152
  %v163 = vpack.c.b16 %v155, %v154
  %v188 = vunpack.c.l.b16 %v60
  %v189 = vunpack.c.h.b16 %v60
  %v190 = vunpack.c.l.b16 %v61
  %v191 = vunpack.c.h.b16 %v61
  %v192 = vunpack.c.l.b16 %v62
  %v193 = vunpack.c.h.b16 %v62
  %v194 = vunpack.c.l.b16 %v63
  %v195 = vunpack.c.h.b16 %v63
  %v196 = vunpack.c.l.b16 %v64
  %v197 = vunpack.c.h.b16 %v64
  %v198 = vunpack.c.l.b16 %v65
  %v199 = vunpack.c.h.b16 %v65
  %v200 = vunpack.c.l.b16 %v66
  %v201 = vunpack.c.h.b16 %v66
  %v202 = vunpack.c.l.b16 %v67
  %v203 = vunpack.c.h.b16 %v67
  %v204 = vunpack.c.l.b16 %v68
  %v205 = vunpack.c.h.b16 %v68
  %v206 = vunpack.c.l.b16 %v69
  %v207 = vunpack.c.h.b16 %v69
  %v208 = vunpack.c.l.b16 %v70
  %v209 = vunpack.c.h.b16 %v70
  %v210 = vunpack.c.l.b16 %v71
  %v211 = vunpack.c.h.b16 %v71
  %v212 = vunpack.c.l.b16 %v72
  %v213 = vunpack.c.h.b16 %v72
  %v214 = vunpack.c.l.b16 %v73
  %v215 = vunpack.c.h.b16 %v73
  %v216 = vunpack.c.l.b16 %v74
  %v217 = vunpack.c.h.b16 %v74
  %v218 = vunpack.c.l.b16 %v75
  %v219 = vunpack.c.h.b16 %v75
  %v220 = vpack.c.b16 %v190, %v188
  %v221 = vpack.c.b16 %v191, %v189
  %v222 = vpack.c.b16 %v194, %v192
  %v223 = vpack.c.b16 %v195, %v193
  %v224 = vpack.c.b16 %v198, %v196
  %v225 = vpack.c.b16 %v199, %v197
  %v226 = vpack.c.b16 %v202, %v200
  %v227 = vpack.c.b16 %v203, %v201
  %v228 = vpack.c.b16 %v206, %v204
  %v229 = vpack.c.b16 %v207, %v205
  %v230 = vpack.c.b16 %v210, %v208
  %v231 = vpack.c.b16 %v211, %v209
  %v232 = vpack.c.b16 %v214, %v212
  %v233 = vpack.c.b16 %v215, %v213
  %v234 = vpack.c.b16 %v218, %v216
  %v235 = vpack.c.b16 %v219, %v217
  %252 = vmatprep.subr.bf16.mxu0 %v235
  %253 = vmatpush1.bf16.msra.mxu0 %v234
  %254 = vmatprep.subr.bf16.mxu0 %v233
  %255 = vmatpush1.bf16.msra.mxu0 %v232
  %256 = vmatprep.subr.bf16.mxu0 %v231
  %257 = vmatpush1.bf16.msra.mxu0 %v230
  %258 = vmatprep.subr.bf16.mxu0 %v229
  %259 = vmatpush1.bf16.msra.mxu0 %v228
  %260 = vmatprep.subr.bf16.mxu0 %v227
  %261 = vmatpush1.bf16.msra.mxu0 %v226
  %262 = vmatprep.subr.bf16.mxu0 %v225
  %263 = vmatpush1.bf16.msra.mxu0 %v224
  %264 = vmatprep.subr.bf16.mxu0 %v223
  %265 = vmatpush1.bf16.msra.mxu0 %v222
  %266 = vmatprep.subr.bf16.mxu0 %v221
  %267 = vmatpush1.bf16.msra.mxu0 %v220
  %268 = vmatprep.subr.bf16.mxu0 0
  %269 = vmatpush2.bf16.msra.mxu0 0
  %270 = vmatprep.subr.bf16.mxu0 0
  %271 = vmatpush2.bf16.msra.mxu0 0
  %272 = vmatprep.subr.bf16.mxu0 0
  %273 = vmatpush2.bf16.msra.mxu0 0
  %274 = vmatprep.subr.bf16.mxu0 0
  %275 = vmatpush2.bf16.msra.mxu0 0
  %276 = vmatprep.subr.bf16.mxu0 0
  %277 = vmatpush2.bf16.msra.mxu0 0
  %278 = vmatprep.subr.bf16.mxu0 0
  %279 = vmatpush2.bf16.msra.mxu0 0
  %280 = vmatprep.subr.bf16.mxu0 0
  %281 = vmatpush2.bf16.msra.mxu0 0
  %282 = vmatprep.subr.bf16.mxu0 0
  %283 = vmatpush2.bf16.msra.mxu0 0
  %284 = vmatprep.mubr.bf16.mxu0 0
  %285 = vmatmul.mubr.bf16.gmra.mxu0 %v156
  %v286 = vpop.f32.mrf.mxu0
  %v287 = vadd.f32 0.0, %v286
  %v288 = vpop.f32.mrf.mxu0
  %v289 = vadd.f32 0.0, %v288
  %v290 = vpop.f32.mrf.mxu0
  %v291 = vadd.f32 0.0, %v290
  %v292 = vpop.f32.mrf.mxu0
  %v293 = vadd.f32 0.0, %v292
  %294 = vmatprep.mubr.bf16.mxu0 0
  %295 = vmatmul.mubr.bf16.gmra.mxu0 %v157
  %v296 = vpop.f32.mrf.mxu0
  %v297 = vadd.f32 0.0, %v296
  %v298 = vpop.f32.mrf.mxu0
  %v299 = vadd.f32 0.0, %v298
  %v300 = vpop.f32.mrf.mxu0
  %v301 = vadd.f32 0.0, %v300
  %v302 = vpop.f32.mrf.mxu0
  %v303 = vadd.f32 0.0, %v302
  %304 = vmatprep.mubr.bf16.mxu0 0
  %305 = vmatmul.mubr.bf16.gmra.mxu0 %v158
  %v306 = vpop.f32.mrf.mxu0
  %v307 = vadd.f32 0.0, %v306
  %v308 = vpop.f32.mrf.mxu0
  %v309 = vadd.f32 0.0, %v308
  %v310 = vpop.f32.mrf.mxu0
  %v311 = vadd.f32 0.0, %v310
  %v312 = vpop.f32.mrf.mxu0
  %v313 = vadd.f32 0.0, %v312
  %314 = vmatprep.mubr.bf16.mxu0 0
  %315 = vmatmul.mubr.bf16.gmra.mxu0 %v159
  %v316 = vpop.f32.mrf.mxu0
  %v317 = vadd.f32 0.0, %v316
  %v318 = vpop.f32.mrf.mxu0
  %v319 = vadd.f32 0.0, %v318
  %v320 = vpop.f32.mrf.mxu0
  %v321 = vadd.f32 0.0, %v320
  %v322 = vpop.f32.mrf.mxu0
  %v323 = vadd.f32 0.0, %v322
  %324 = vmatprep.mubr.bf16.mxu0 0
  %325 = vmatmul.mubr.bf16.gmra.mxu0 %v160
  %v326 = vpop.f32.mrf.mxu0
  %v327 = vadd.f32 0.0, %v326
  %v328 = vpop.f32.mrf.mxu0
  %v329 = vadd.f32 0.0, %v328
  %v330 = vpop.f32.mrf.mxu0
  %v331 = vadd.f32 0.0, %v330
  %v332 = vpop.f32.mrf.mxu0
  %v333 = vadd.f32 0.0, %v332
  %334 = vmatprep.mubr.bf16.mxu0 0
  %335 = vmatmul.mubr.bf16.gmra.mxu0 %v161
  %v336 = vpop.f32.mrf.mxu0
  %v337 = vadd.f32 0.0, %v336
  %v338 = vpop.f32.mrf.mxu0
  %v339 = vadd.f32 0.0, %v338
  %v340 = vpop.f32.mrf.mxu0
  %v341 = vadd.f32 0.0, %v340
  %v342 = vpop.f32.mrf.mxu0
  %v343 = vadd.f32 0.0, %v342
  %344 = vmatprep.mubr.bf16.mxu0 0
  %345 = vmatmul.mubr.bf16.gmra.mxu0 %v162
  %v346 = vpop.f32.mrf.mxu0
  %v347 = vadd.f32 0.0, %v346
  %v348 = vpop.f32.mrf.mxu0
  %v349 = vadd.f32 0.0, %v348
  %v350 = vpop.f32.mrf.mxu0
  %v351 = vadd.f32 0.0, %v350
  %v352 = vpop.f32.mrf.mxu0
  %v353 = vadd.f32 0.0, %v352
  %354 = vmatprep.mubr.bf16.mxu0 0
  %355 = vmatmul.mubr.bf16.gmra.mxu0 %v163
  %v356 = vpop.f32.mrf.mxu0
  %v357 = vadd.f32 0.0, %v356
  %v358 = vpop.f32.mrf.mxu0
  %v359 = vadd.f32 0.0, %v358
  %v360 = vpop.f32.mrf.mxu0
  %v361 = vadd.f32 0.0, %v360
  %v362 = vpop.f32.mrf.mxu0
  %v363 = vadd.f32 0.0, %v362
  %364 = vdwg.mxu0
  %v365 = vadd.f32 %v76, %v287
  %v366 = vadd.f32 %v77, %v289
  %v367 = vadd.f32 %v78, %v291
  %v368 = vadd.f32 %v79, %v293
  %v369 = vadd.f32 %v80, %v297
  %v370 = vadd.f32 %v81, %v299
  %v371 = vadd.f32 %v82, %v301
  %v372 = vadd.f32 %v83, %v303
  %v373 = vadd.f32 %v84, %v307
  %v374 = vadd.f32 %v85, %v309
  %v375 = vadd.f32 %v86, %v311
  %v376 = vadd.f32 %v87, %v313
  %v377 = vadd.f32 %v88, %v317
  %v378 = vadd.f32 %v89, %v319
  %v379 = vadd.f32 %v90, %v321
  %v380 = vadd.f32 %v91, %v323
  %v381 = vadd.f32 %v92, %v327
  %v382 = vadd.f32 %v93, %v329
  %v383 = vadd.f32 %v94, %v331
  %v384 = vadd.f32 %v95, %v333
  %v385 = vadd.f32 %v96, %v337
  %v386 = vadd.f32 %v97, %v339
  %v387 = vadd.f32 %v98, %v341
  %v388 = vadd.f32 %v99, %v343
  %v389 = vadd.f32 %v100, %v347
  %v390 = vadd.f32 %v101, %v349
  %v391 = vadd.f32 %v102, %v351
  %v392 = vadd.f32 %v103, %v353
  %v393 = vadd.f32 %v104, %v357
  %v394 = vadd.f32 %v105, %v359
  %v395 = vadd.f32 %v106, %v361
  %v396 = vadd.f32 %v107, %v363
  %397 = vst [vmem:[#allocation2] sm:$0xff] %v365
  %398 = vst [vmem:[#allocation2 + $0x8] sm:$0xff] %v366
  %399 = vst [vmem:[#allocation2 + $0x10] sm:$0xff] %v367
  %400 = vst [vmem:[#allocation2 + $0x18] sm:$0xff] %v368
  %401 = vst [vmem:[#allocation2 + $0x20] sm:$0xff] %v369
  %402 = vst [vmem:[#allocation2 + $0x28] sm:$0xff] %v370
  %403 = vst [vmem:[#allocation2 + $0x30] sm:$0xff] %v371
  %404 = vst [vmem:[#allocation2 + $0x38] sm:$0xff] %v372
  %405 = vst [vmem:[#allocation2 + $0x40] sm:$0xff] %v373
  %406 = vst [vmem:[#allocation2 + $0x48] sm:$0xff] %v374
  %407 = vst [vmem:[#allocation2 + $0x50] sm:$0xff] %v375
  %408 = vst [vmem:[#allocation2 + $0x58] sm:$0xff] %v376
  %409 = vst [vmem:[#allocation2 + $0x60] sm:$0xff] %v377
  %410 = vst [vmem:[#allocation2 + $0x68] sm:$0xff] %v378
  %411 = vst [vmem:[#allocation2 + $0x70] sm:$0xff] %v379
  %412 = vst [vmem:[#allocation2 + $0x78] sm:$0xff] %v380
  %413 = vst [vmem:[#allocation2 + $0x80] sm:$0xff] %v381
  %414 = vst [vmem:[#allocation2 + $0x88] sm:$0xff] %v382
  %415 = vst [vmem:[#allocation2 + $0x90] sm:$0xff] %v383
  %416 = vst [vmem:[#allocation2 + $0x98] sm:$0xff] %v384
  %417 = vst [vmem:[#allocation2 + $0xa0] sm:$0xff] %v385
  %418 = vst [vmem:[#allocation2 + $0xa8] sm:$0xff] %v386
  %419 = vst [vmem:[#allocation2 + $0xb0] sm:$0xff] %v387
  %420 = vst [vmem:[#allocation2 + $0xb8] sm:$0xff] %v388
  %421 = vst [vmem:[#allocation2 + $0xc0] sm:$0xff] %v389
  %422 = vst [vmem:[#allocation2 + $0xc8] sm:$0xff] %v390
  %423 = vst [vmem:[#allocation2 + $0xd0] sm:$0xff] %v391
  %424 = vst [vmem:[#allocation2 + $0xd8] sm:$0xff] %v392
  %425 = vst [vmem:[#allocation2 + $0xe0] sm:$0xff] %v393
  %426 = vst [vmem:[#allocation2 + $0xe8] sm:$0xff] %v394
  %427 = vst [vmem:[#allocation2 + $0xf0] sm:$0xff] %v395
  %428 = vst [vmem:[#allocation2 + $0xf8] sm:$0xff] %v396
  // Predicated region
  $region22: #{aaf_gcnconv_forward.3} parent=0 // pred_check
    %p429 = pneg %p18
  $region23: #{aaf_gcnconv_forward.3} parent=0 // pred_check_branch
    %431 = sbr.rel (%p429) target = $region25
  $region24: #{aaf_gcnconv_forward.3} parent=0 // pred_region
    %v432 = vld [vmem:[#allocation2] sm:$0xff]
    %v433 = vld [vmem:[#allocation2 + $0x8] sm:$0xff]
    %v434 = vld [vmem:[#allocation2 + $0x10] sm:$0xff]
    %v435 = vld [vmem:[#allocation2 + $0x18] sm:$0xff]
    %v436 = vld [vmem:[#allocation2 + $0x20] sm:$0xff]
    %v437 = vld [vmem:[#allocation2 + $0x28] sm:$0xff]
    %v438 = vld [vmem:[#allocation2 + $0x30] sm:$0xff]
    %v439 = vld [vmem:[#allocation2 + $0x38] sm:$0xff]
    %v440 = vld [vmem:[#allocation2 + $0x40] sm:$0xff]
    %v441 = vld [vmem:[#allocation2 + $0x48] sm:$0xff]
    %v442 = vld [vmem:[#allocation2 + $0x50] sm:$0xff]
    %v443 = vld [vmem:[#allocation2 + $0x58] sm:$0xff]
    %v444 = vld [vmem:[#allocation2 + $0x60] sm:$0xff]
    %v445 = vld [vmem:[#allocation2 + $0x68] sm:$0xff]
    %v446 = vld [vmem:[#allocation2 + $0x70] sm:$0xff]
    %v447 = vld [vmem:[#allocation2 + $0x78] sm:$0xff]
    %v448 = vld [vmem:[#allocation2 + $0x80] sm:$0xff]
    %v449 = vld [vmem:[#allocation2 + $0x88] sm:$0xff]
    %v450 = vld [vmem:[#allocation2 + $0x90] sm:$0xff]
    %v451 = vld [vmem:[#allocation2 + $0x98] sm:$0xff]
    %v452 = vld [vmem:[#allocation2 + $0xa0] sm:$0xff]
    %v453 = vld [vmem:[#allocation2 + $0xa8] sm:$0xff]
    %v454 = vld [vmem:[#allocation2 + $0xb0] sm:$0xff]
    %v455 = vld [vmem:[#allocation2 + $0xb8] sm:$0xff]
    %v456 = vld [vmem:[#allocation2 + $0xc0] sm:$0xff]
    %v457 = vld [vmem:[#allocation2 + $0xc8] sm:$0xff]
    %v458 = vld [vmem:[#allocation2 + $0xd0] sm:$0xff]
    %v459 = vld [vmem:[#allocation2 + $0xd8] sm:$0xff]
    %v460 = vld [vmem:[#allocation2 + $0xe0] sm:$0xff]
    %v461 = vld [vmem:[#allocation2 + $0xe8] sm:$0xff]
    %v462 = vld [vmem:[#allocation2 + $0xf0] sm:$0xff]
    %v463 = vld [vmem:[#allocation2 + $0xf8] sm:$0xff]
    %v464 = vld [vmem:[%s2] sm:$0x3]
    %v466 = vlaneseq
    %v467 = vshrl.u32 %v466, 7
    %v468 = vsub.s32 0, %v467
    %v469 = vrot.slane %v464, %v468
    %v470 = vlaneseq
    %v471 = vshrl.u32 %v470, 7
    %v472 = vsub.s32 1, %v471
    %v473 = vrot.slane %v464, %v472
    %v476 = vadd.f32 %v432, %v469
    %v477 = vadd.f32 %v433, %v473
    %v478 = vadd.f32 %v434, %v469
    %v479 = vadd.f32 %v435, %v473
    %v480 = vadd.f32 %v436, %v469
    %v481 = vadd.f32 %v437, %v473
    %v482 = vadd.f32 %v438, %v469
    %v483 = vadd.f32 %v439, %v473
    %v484 = vadd.f32 %v440, %v469
    %v485 = vadd.f32 %v441, %v473
    %v486 = vadd.f32 %v442, %v469
    %v487 = vadd.f32 %v443, %v473
    %v488 = vadd.f32 %v444, %v469
    %v489 = vadd.f32 %v445, %v473
    %v490 = vadd.f32 %v446, %v469
    %v491 = vadd.f32 %v447, %v473
    %v492 = vadd.f32 %v448, %v469
    %v493 = vadd.f32 %v449, %v473
    %v494 = vadd.f32 %v450, %v469
    %v495 = vadd.f32 %v451, %v473
    %v496 = vadd.f32 %v452, %v469
    %v497 = vadd.f32 %v453, %v473
    %v498 = vadd.f32 %v454, %v469
    %v499 = vadd.f32 %v455, %v473
    %v500 = vadd.f32 %v456, %v469
    %v501 = vadd.f32 %v457, %v473
    %v502 = vadd.f32 %v458, %v469
    %v503 = vadd.f32 %v459, %v473
    %v504 = vadd.f32 %v460, %v469
    %v505 = vadd.f32 %v461, %v473
    %v506 = vadd.f32 %v462, %v469
    %v507 = vadd.f32 %v463, %v473
    %v508 = vmax.f32 %v476, 0.0
    %v509 = vmax.f32 %v477, 0.0
    %v510 = vmax.f32 %v478, 0.0
    %v511 = vmax.f32 %v479, 0.0
    %v512 = vmax.f32 %v480, 0.0
    %v513 = vmax.f32 %v481, 0.0
    %v514 = vmax.f32 %v482, 0.0
    %v515 = vmax.f32 %v483, 0.0
    %v516 = vmax.f32 %v484, 0.0
    %v517 = vmax.f32 %v485, 0.0
    %v518 = vmax.f32 %v486, 0.0
    %v519 = vmax.f32 %v487, 0.0
    %v520 = vmax.f32 %v488, 0.0
    %v521 = vmax.f32 %v489, 0.0
    %v522 = vmax.f32 %v490, 0.0
    %v523 = vmax.f32 %v491, 0.0
    %v524 = vmax.f32 %v492, 0.0
    %v525 = vmax.f32 %v493, 0.0
    %v526 = vmax.f32 %v494, 0.0
    %v527 = vmax.f32 %v495, 0.0
    %v528 = vmax.f32 %v496, 0.0
    %v529 = vmax.f32 %v497, 0.0
    %v530 = vmax.f32 %v498, 0.0
    %v531 = vmax.f32 %v499, 0.0
    %v532 = vmax.f32 %v500, 0.0
    %v533 = vmax.f32 %v501, 0.0
    %v534 = vmax.f32 %v502, 0.0
    %v535 = vmax.f32 %v503, 0.0
    %v536 = vmax.f32 %v504, 0.0
    %v537 = vmax.f32 %v505, 0.0
    %v538 = vmax.f32 %v506, 0.0
    %v539 = vmax.f32 %v507, 0.0
    %v540 = vpack.c.bf16 %v510, %v508
    %v541 = vpack.c.bf16 %v511, %v509
    %v542 = vpack.c.bf16 %v514, %v512
    %v543 = vpack.c.bf16 %v515, %v513
    %v544 = vpack.c.bf16 %v518, %v516
    %v545 = vpack.c.bf16 %v519, %v517
    %v546 = vpack.c.bf16 %v522, %v520
    %v547 = vpack.c.bf16 %v523, %v521
    %v548 = vpack.c.bf16 %v526, %v524
    %v549 = vpack.c.bf16 %v527, %v525
    %v550 = vpack.c.bf16 %v530, %v528
    %v551 = vpack.c.bf16 %v531, %v529
    %v552 = vpack.c.bf16 %v534, %v532
    %v553 = vpack.c.bf16 %v535, %v533
    %v554 = vpack.c.bf16 %v538, %v536
    %v555 = vpack.c.bf16 %v539, %v537
    %v556 = vld [vmem:[%s3] sm:$0xff]
    %v557 = vld [vmem:[%s3 + $0x8] sm:$0xff]
    %v558 = vld [vmem:[%s3 + $0x10] sm:$0xff]
    %v559 = vld [vmem:[%s3 + $0x18] sm:$0xff]
    %v560 = vld [vmem:[%s3 + $0x20] sm:$0xff]
    %v561 = vld [vmem:[%s3 + $0x28] sm:$0xff]
    %v562 = vld [vmem:[%s3 + $0x30] sm:$0xff]
    %v563 = vld [vmem:[%s3 + $0x38] sm:$0xff]
    %v564 = vld [vmem:[%s3 + $0x40] sm:$0xff]
    %v565 = vld [vmem:[%s3 + $0x48] sm:$0xff]
    %v566 = vld [vmem:[%s3 + $0x50] sm:$0xff]
    %v567 = vld [vmem:[%s3 + $0x58] sm:$0xff]
    %v568 = vld [vmem:[%s3 + $0x60] sm:$0xff]
    %v569 = vld [vmem:[%s3 + $0x68] sm:$0xff]
    %v570 = vld [vmem:[%s3 + $0x70] sm:$0xff]
    %v571 = vld [vmem:[%s3 + $0x78] sm:$0xff]
    %v572 = vld [vmem:[%s3 + $0x80] sm:$0xff]
    %v573 = vld [vmem:[%s3 + $0x88] sm:$0xff]
    %v574 = vld [vmem:[%s3 + $0x90] sm:$0xff]
    %v575 = vld [vmem:[%s3 + $0x98] sm:$0xff]
    %v576 = vld [vmem:[%s3 + $0xa0] sm:$0xff]
    %v577 = vld [vmem:[%s3 + $0xa8] sm:$0xff]
    %v578 = vld [vmem:[%s3 + $0xb0] sm:$0xff]
    %v579 = vld [vmem:[%s3 + $0xb8] sm:$0xff]
    %v580 = vld [vmem:[%s3 + $0xc0] sm:$0xff]
    %v581 = vld [vmem:[%s3 + $0xc8] sm:$0xff]
    %v582 = vld [vmem:[%s3 + $0xd0] sm:$0xff]
    %v583 = vld [vmem:[%s3 + $0xd8] sm:$0xff]
    %v584 = vld [vmem:[%s3 + $0xe0] sm:$0xff]
    %v585 = vld [vmem:[%s3 + $0xe8] sm:$0xff]
    %v586 = vld [vmem:[%s3 + $0xf0] sm:$0xff]
    %v587 = vld [vmem:[%s3 + $0xf8] sm:$0xff]
    %v620 = vunpack.c.l.b16 %v556
    %v621 = vunpack.c.h.b16 %v556
    %v622 = vunpack.c.l.b16 %v557
    %v623 = vunpack.c.h.b16 %v557
    %v624 = vunpack.c.l.b16 %v558
    %v625 = vunpack.c.h.b16 %v558
    %v626 = vunpack.c.l.b16 %v559
    %v627 = vunpack.c.h.b16 %v559
    %v628 = vunpack.c.l.b16 %v560
    %v629 = vunpack.c.h.b16 %v560
    %v630 = vunpack.c.l.b16 %v561
    %v631 = vunpack.c.h.b16 %v561
    %v632 = vunpack.c.l.b16 %v562
    %v633 = vunpack.c.h.b16 %v562
    %v634 = vunpack.c.l.b16 %v563
    %v635 = vunpack.c.h.b16 %v563
    %v636 = vunpack.c.l.b16 %v564
    %v637 = vunpack.c.h.b16 %v564
    %v638 = vunpack.c.l.b16 %v565
    %v639 = vunpack.c.h.b16 %v565
    %v640 = vunpack.c.l.b16 %v566
    %v641 = vunpack.c.h.b16 %v566
    %v642 = vunpack.c.l.b16 %v567
    %v643 = vunpack.c.h.b16 %v567
    %v644 = vunpack.c.l.b16 %v568
    %v645 = vunpack.c.h.b16 %v568
    %v646 = vunpack.c.l.b16 %v569
    %v647 = vunpack.c.h.b16 %v569
    %v648 = vunpack.c.l.b16 %v570
    %v649 = vunpack.c.h.b16 %v570
    %v650 = vunpack.c.l.b16 %v571
    %v651 = vunpack.c.h.b16 %v571
    %v652 = vunpack.c.l.b16 %v572
    %v653 = vunpack.c.h.b16 %v572
    %v654 = vunpack.c.l.b16 %v573
    %v655 = vunpack.c.h.b16 %v573
    %v656 = vunpack.c.l.b16 %v574
    %v657 = vunpack.c.h.b16 %v574
    %v658 = vunpack.c.l.b16 %v575
    %v659 = vunpack.c.h.b16 %v575
    %v660 = vunpack.c.l.b16 %v576
    %v661 = vunpack.c.h.b16 %v576
    %v662 = vunpack.c.l.b16 %v577
    %v663 = vunpack.c.h.b16 %v577
    %v664 = vunpack.c.l.b16 %v578
    %v665 = vunpack.c.h.b16 %v578
    %v666 = vunpack.c.l.b16 %v579
    %v667 = vunpack.c.h.b16 %v579
    %v668 = vunpack.c.l.b16 %v580
    %v669 = vunpack.c.h.b16 %v580
    %v670 = vunpack.c.l.b16 %v581
    %v671 = vunpack.c.h.b16 %v581
    %v672 = vunpack.c.l.b16 %v582
    %v673 = vunpack.c.h.b16 %v582
    %v674 = vunpack.c.l.b16 %v583
    %v675 = vunpack.c.h.b16 %v583
    %v676 = vunpack.c.l.b16 %v584
    %v677 = vunpack.c.h.b16 %v584
    %v678 = vunpack.c.l.b16 %v585
    %v679 = vunpack.c.h.b16 %v585
    %v680 = vunpack.c.l.b16 %v586
    %v681 = vunpack.c.h.b16 %v586
    %v682 = vunpack.c.l.b16 %v587
    %v683 = vunpack.c.h.b16 %v587
    %v684 = vpack.c.b16 %v622, %v620
    %v685 = vpack.c.b16 %v623, %v621
    %v686 = vpack.c.b16 %v626, %v624
    %v687 = vpack.c.b16 %v627, %v625
    %v688 = vpack.c.b16 %v630, %v628
    %v689 = vpack.c.b16 %v631, %v629
    %v690 = vpack.c.b16 %v634, %v632
    %v691 = vpack.c.b16 %v635, %v633
    %v692 = vpack.c.b16 %v638, %v636
    %v693 = vpack.c.b16 %v639, %v637
    %v694 = vpack.c.b16 %v642, %v640
    %v695 = vpack.c.b16 %v643, %v641
    %v696 = vpack.c.b16 %v646, %v644
    %v697 = vpack.c.b16 %v647, %v645
    %v698 = vpack.c.b16 %v650, %v648
    %v699 = vpack.c.b16 %v651, %v649
    %v700 = vpack.c.b16 %v654, %v652
    %v701 = vpack.c.b16 %v655, %v653
    %v702 = vpack.c.b16 %v658, %v656
    %v703 = vpack.c.b16 %v659, %v657
    %v704 = vpack.c.b16 %v662, %v660
    %v705 = vpack.c.b16 %v663, %v661
    %v706 = vpack.c.b16 %v666, %v664
    %v707 = vpack.c.b16 %v667, %v665
    %v708 = vpack.c.b16 %v670, %v668
    %v709 = vpack.c.b16 %v671, %v669
    %v710 = vpack.c.b16 %v674, %v672
    %v711 = vpack.c.b16 %v675, %v673
    %v712 = vpack.c.b16 %v678, %v676
    %v713 = vpack.c.b16 %v679, %v677
    %v714 = vpack.c.b16 %v682, %v680
    %v715 = vpack.c.b16 %v683, %v681
    %748 = vmatprep.subr.bf16.mxu0 %v699
    %749 = vmatpush1.bf16.msra.mxu0 %v698
    %750 = vmatprep.subr.bf16.mxu0 %v697
    %751 = vmatpush1.bf16.msra.mxu0 %v696
    %752 = vmatprep.subr.bf16.mxu0 %v695
    %753 = vmatpush1.bf16.msra.mxu0 %v694
    %754 = vmatprep.subr.bf16.mxu0 %v693
    %755 = vmatpush1.bf16.msra.mxu0 %v692
    %756 = vmatprep.subr.bf16.mxu0 %v691
    %757 = vmatpush1.bf16.msra.mxu0 %v690
    %758 = vmatprep.subr.bf16.mxu0 %v689
    %759 = vmatpush1.bf16.msra.mxu0 %v688
    %760 = vmatprep.subr.bf16.mxu0 %v687
    %761 = vmatpush1.bf16.msra.mxu0 %v686
    %762 = vmatprep.subr.bf16.mxu0 %v685
    %763 = vmatpush1.bf16.msra.mxu0 %v684
    %764 = vmatprep.subr.bf16.mxu0 %v715
    %765 = vmatpush2.bf16.msra.mxu0 %v714
    %766 = vmatprep.subr.bf16.mxu0 %v713
    %767 = vmatpush2.bf16.msra.mxu0 %v712
    %768 = vmatprep.subr.bf16.mxu0 %v711
    %769 = vmatpush2.bf16.msra.mxu0 %v710
    %770 = vmatprep.subr.bf16.mxu0 %v709
    %771 = vmatpush2.bf16.msra.mxu0 %v708
    %772 = vmatprep.subr.bf16.mxu0 %v707
    %773 = vmatpush2.bf16.msra.mxu0 %v706
    %774 = vmatprep.subr.bf16.mxu0 %v705
    %775 = vmatpush2.bf16.msra.mxu0 %v704
    %776 = vmatprep.subr.bf16.mxu0 %v703
    %777 = vmatpush2.bf16.msra.mxu0 %v702
    %778 = vmatprep.subr.bf16.mxu0 %v701
    %779 = vmatpush2.bf16.msra.mxu0 %v700
    %780 = vmatprep.mubr.bf16.mxu0 %v541
    %781 = vmatmul.mubr.bf16.gmra.mxu0 %v540
    %v782 = vpop.f32.mrf.mxu0
    %v783 = vadd.f32 0.0, %v782
    %v784 = vpop.f32.mrf.mxu0
    %v785 = vadd.f32 0.0, %v784
    %v786 = vpop.f32.mrf.mxu0
    %v787 = vadd.f32 0.0, %v786
    %v788 = vpop.f32.mrf.mxu0
    %v789 = vadd.f32 0.0, %v788
    %790 = vmatprep.mubr.bf16.mxu0 %v543
    %791 = vmatmul.mubr.bf16.gmra.mxu0 %v542
    %v792 = vpop.f32.mrf.mxu0
    %v793 = vadd.f32 0.0, %v792
    %v794 = vpop.f32.mrf.mxu0
    %v795 = vadd.f32 0.0, %v794
    %v796 = vpop.f32.mrf.mxu0
    %v797 = vadd.f32 0.0, %v796
    %v798 = vpop.f32.mrf.mxu0
    %v799 = vadd.f32 0.0, %v798
    %800 = vmatprep.mubr.bf16.mxu0 %v545
    %801 = vmatmul.mubr.bf16.gmra.mxu0 %v544
    %v802 = vpop.f32.mrf.mxu0
    %v803 = vadd.f32 0.0, %v802
    %v804 = vpop.f32.mrf.mxu0
    %v805 = vadd.f32 0.0, %v804
    %v806 = vpop.f32.mrf.mxu0
    %v807 = vadd.f32 0.0, %v806
    %v808 = vpop.f32.mrf.mxu0
    %v809 = vadd.f32 0.0, %v808
    %810 = vmatprep.mubr.bf16.mxu0 %v547
    %811 = vmatmul.mubr.bf16.gmra.mxu0 %v546
    %v812 = vpop.f32.mrf.mxu0
    %v813 = vadd.f32 0.0, %v812
    %v814 = vpop.f32.mrf.mxu0
    %v815 = vadd.f32 0.0, %v814
    %v816 = vpop.f32.mrf.mxu0
    %v817 = vadd.f32 0.0, %v816
    %v818 = vpop.f32.mrf.mxu0
    %v819 = vadd.f32 0.0, %v818
    %820 = vmatprep.mubr.bf16.mxu0 %v549
    %821 = vmatmul.mubr.bf16.gmra.mxu0 %v548
    %v822 = vpop.f32.mrf.mxu0
    %v823 = vadd.f32 0.0, %v822
    %v824 = vpop.f32.mrf.mxu0
    %v825 = vadd.f32 0.0, %v824
    %v826 = vpop.f32.mrf.mxu0
    %v827 = vadd.f32 0.0, %v826
    %v828 = vpop.f32.mrf.mxu0
    %v829 = vadd.f32 0.0, %v828
    %830 = vmatprep.mubr.bf16.mxu0 %v551
    %831 = vmatmul.mubr.bf16.gmra.mxu0 %v550
    %v832 = vpop.f32.mrf.mxu0
    %v833 = vadd.f32 0.0, %v832
    %v834 = vpop.f32.mrf.mxu0
    %v835 = vadd.f32 0.0, %v834
    %v836 = vpop.f32.mrf.mxu0
    %v837 = vadd.f32 0.0, %v836
    %v838 = vpop.f32.mrf.mxu0
    %v839 = vadd.f32 0.0, %v838
    %840 = vmatprep.mubr.bf16.mxu0 %v553
    %841 = vmatmul.mubr.bf16.gmra.mxu0 %v552
    %v842 = vpop.f32.mrf.mxu0
    %v843 = vadd.f32 0.0, %v842
    %v844 = vpop.f32.mrf.mxu0
    %v845 = vadd.f32 0.0, %v844
    %v846 = vpop.f32.mrf.mxu0
    %v847 = vadd.f32 0.0, %v846
    %v848 = vpop.f32.mrf.mxu0
    %v849 = vadd.f32 0.0, %v848
    %850 = vmatprep.mubr.bf16.mxu0 %v555
    %851 = vmatmul.mubr.bf16.gmra.mxu0 %v554
    %v852 = vpop.f32.mrf.mxu0
    %v853 = vadd.f32 0.0, %v852
    %v854 = vpop.f32.mrf.mxu0
    %v855 = vadd.f32 0.0, %v854
    %v856 = vpop.f32.mrf.mxu0
    %v857 = vadd.f32 0.0, %v856
    %v858 = vpop.f32.mrf.mxu0
    %v859 = vadd.f32 0.0, %v858
    %860 = vdwg.mxu0
    %v861 = vpack.c.bf16 %v787, %v783
    %v862 = vpack.c.bf16 %v789, %v785
    %v863 = vpack.c.bf16 %v797, %v793
    %v864 = vpack.c.bf16 %v799, %v795
    %v865 = vpack.c.bf16 %v807, %v803
    %v866 = vpack.c.bf16 %v809, %v805
    %v867 = vpack.c.bf16 %v817, %v813
    %v868 = vpack.c.bf16 %v819, %v815
    %v869 = vpack.c.bf16 %v827, %v823
    %v870 = vpack.c.bf16 %v829, %v825
    %v871 = vpack.c.bf16 %v837, %v833
    %v872 = vpack.c.bf16 %v839, %v835
    %v873 = vpack.c.bf16 %v847, %v843
    %v874 = vpack.c.bf16 %v849, %v845
    %v875 = vpack.c.bf16 %v857, %v853
    %v876 = vpack.c.bf16 %v859, %v855
    %v893 = vunpack.c.l.b16 %v861
    %v894 = vunpack.c.l.b16 %v862
    %v895 = vunpack.c.h.b16 %v861
    %v896 = vunpack.c.h.b16 %v862
    %v897 = vunpack.c.l.b16 %v863
    %v898 = vunpack.c.l.b16 %v864
    %v899 = vunpack.c.h.b16 %v863
    %v900 = vunpack.c.h.b16 %v864
    %v901 = vunpack.c.l.b16 %v865
    %v902 = vunpack.c.l.b16 %v866
    %v903 = vunpack.c.h.b16 %v865
    %v904 = vunpack.c.h.b16 %v866
    %v905 = vunpack.c.l.b16 %v867
    %v906 = vunpack.c.l.b16 %v868
    %v907 = vunpack.c.h.b16 %v867
    %v908 = vunpack.c.h.b16 %v868
    %v909 = vunpack.c.l.b16 %v869
    %v910 = vunpack.c.l.b16 %v870
    %v911 = vunpack.c.h.b16 %v869
    %v912 = vunpack.c.h.b16 %v870
    %v913 = vunpack.c.l.b16 %v871
    %v914 = vunpack.c.l.b16 %v872
    %v915 = vunpack.c.h.b16 %v871
    %v916 = vunpack.c.h.b16 %v872
    %v917 = vunpack.c.l.b16 %v873
    %v918 = vunpack.c.l.b16 %v874
    %v919 = vunpack.c.h.b16 %v873
    %v920 = vunpack.c.h.b16 %v874
    %v921 = vunpack.c.l.b16 %v875
    %v922 = vunpack.c.l.b16 %v876
    %v923 = vunpack.c.h.b16 %v875
    %v924 = vunpack.c.h.b16 %v876
    %v925 = vpack.c.b16 %v894, %v893
    %v926 = vpack.c.b16 %v896, %v895
    %v927 = vpack.c.b16 %v898, %v897
    %v928 = vpack.c.b16 %v900, %v899
    %v929 = vpack.c.b16 %v902, %v901
    %v930 = vpack.c.b16 %v904, %v903
    %v931 = vpack.c.b16 %v906, %v905
    %v932 = vpack.c.b16 %v908, %v907
    %v933 = vpack.c.b16 %v910, %v909
    %v934 = vpack.c.b16 %v912, %v911
    %v935 = vpack.c.b16 %v914, %v913
    %v936 = vpack.c.b16 %v916, %v915
    %v937 = vpack.c.b16 %v918, %v917
    %v938 = vpack.c.b16 %v920, %v919
    %v939 = vpack.c.b16 %v922, %v921
    %v940 = vpack.c.b16 %v924, %v923
    %957 = vst [vmem:[%s4] sm:$0xff] %v925
    %958 = vst [vmem:[%s4 + $0x8] sm:$0xff] %v926
    %959 = vst [vmem:[%s4 + $0x10] sm:$0xff] %v927
    %960 = vst [vmem:[%s4 + $0x18] sm:$0xff] %v928
    %961 = vst [vmem:[%s4 + $0x20] sm:$0xff] %v929
    %962 = vst [vmem:[%s4 + $0x28] sm:$0xff] %v930
    %963 = vst [vmem:[%s4 + $0x30] sm:$0xff] %v931
    %964 = vst [vmem:[%s4 + $0x38] sm:$0xff] %v932
    %965 = vst [vmem:[%s4 + $0x40] sm:$0xff] %v933
    %966 = vst [vmem:[%s4 + $0x48] sm:$0xff] %v934
    %967 = vst [vmem:[%s4 + $0x50] sm:$0xff] %v935
    %968 = vst [vmem:[%s4 + $0x58] sm:$0xff] %v936
    %969 = vst [vmem:[%s4 + $0x60] sm:$0xff] %v937
    %970 = vst [vmem:[%s4 + $0x68] sm:$0xff] %v938
    %971 = vst [vmem:[%s4 + $0x70] sm:$0xff] %v939
    %972 = vst [vmem:[%s4 + $0x78] sm:$0xff] %v940
  $region25: #{aaf_gcnconv_forward.3} parent=0 // pred_fallthru
    _
  // Predicated region
  $region26: #{aaf_gcnconv_forward.3} parent=0 // pred_check
    _
  $region27: #{aaf_gcnconv_forward.3} parent=0 // pred_check_branch
    %974 = sbr.rel (0) target = $region29
  $region28: #{aaf_gcnconv_forward.3} parent=0 // pred_region
    _
  $region29: #{aaf_gcnconv_forward.3} parent=0 // pred_fallthru
    _
  // Predicated region
  $region30: #{aaf_gcnconv_forward.3} parent=0 // pred_check
    _
  $region31: #{aaf_gcnconv_forward.3} parent=0 // pred_check_branch
    %976 = sbr.rel (0) target = $region33
  $region32: #{aaf_gcnconv_forward.3} parent=0 // pred_region
    _
  $region33: #{aaf_gcnconv_forward.3} parent=0 // pred_fallthru
    _

</llo_original>
